<compile_context>
chip_gen: v7x
topology: tpu7x:2x2x1
jax: 0.10.0
libtpu: 0.0.40
codegen_flags: <defaults>
</compile_context>

<pallas_src>
import jax
import jax.numpy as jnp
from jax.experimental import pallas as pl
from jax.experimental.pallas import tpu as pltpu


_MAX_TILE_T = 4096  # diminishing HBM-roofline returns beyond ~2-4k lanes per step


def _round_up(x, m):
    return ((x + m - 1) // m) * m


def _vmem_budget_bytes():
    """Generation-aware VMEM budget: ~75% of physical, capped at 96 MiB.
    (v5e/v6e: 128 MiB physical -> 96 MiB; v7x: 64 MiB -> 48 MiB; unknown -> 48 MiB.)"""
    phys = 64 * 1024 * 1024
    try:
        info = pltpu.get_tpu_info()
        phys = int(getattr(info, "vmem_capacity_bytes", phys))
    except Exception:
        pass
    return max(32 * 1024 * 1024, min(phys * 3 // 4, 96 * 1024 * 1024))


def _step_footprint_bytes(tile_t, halo_pad, Cin, Cout, K, pad, act_bytes):
    """Rough per-grid-step VMEM footprint of the fused TemporalBlock kernel."""
    blocks = 2 * act_bytes * (Cin * tile_t + Cin * halo_pad + Cout * tile_t)  # dbl-buffered I/O
    win = act_bytes * Cin * (halo_pad + tile_t)                               # window scratch
    h1 = (4 + act_bytes) * Cout * (pad + tile_t)                              # f32 acc + bf16 copy
    acc2 = 4 * Cout * tile_t
    weights = act_bytes * (K * Cout * (Cin + Cout) + Cout * Cin) + 4 * 3 * Cout
    return blocks + win + h1 + acc2 + weights


def _pick_tiling(T, B, Cin, Cout, K, dilation, act_bytes, budget):
    """Channel-aware time tile: largest 128-multiple divisor of T (or T itself) whose
    per-step footprint fits the VMEM budget; prefers >=2 total grid steps when B == 1
    so the grid can shard across v7x's two TensorCores."""
    pad = (K - 1) * dilation
    halo = 2 * pad  # conv1 is recomputed over an extra `pad` columns -> x halo is 2*pad

    def halo_pad_for(c):
        if halo == 0:
            return 0
        # Lane-align the halo on 128-aligned tiles (zero-fill cost <= 127 extra columns
        # per tile; buys unmasked, lane-aligned scratch fills for the whole x tile).
        return _round_up(halo, 128) if c % 128 == 0 else halo

    cands = {c for c in range(128, T + 1, 128) if T % c == 0}
    cands.add(T)
    fitting = [c for c in cands
               if _step_footprint_bytes(c, halo_pad_for(c), Cin, Cout, K, pad,
                                        act_bytes) <= budget]
    if not fitting:
        # TODO(synk): add a Cout-tiling grid axis for very wide channel counts.
        tile_t = min(cands)
    else:
        pool = fitting
        if B == 1:
            multi = [c for c in pool if T // c >= 2]
            if multi:
                pool = multi
        capped = [c for c in pool if c <= _MAX_TILE_T]
        tile_t = max(capped) if capped else min(pool)
    return tile_t, halo_pad_for(tile_t), pad


def _build_halos(x, halo_pad, tile_t):
    """halos[b, ti] = x[b, :, ti*tile_t - halo_pad : ti*tile_t], zero-filled for t < 0.
    Built from slices of x's own tiles — no full padded copy of x is materialized."""
    B, C, T = x.shape
    num_t = T // tile_t
    if num_t == 1:
        return jnp.zeros((B, 1, C, halo_pad), x.dtype)
    if halo_pad <= tile_t:
        tails = x.reshape(B, C, num_t, tile_t)[:, :, :num_t - 1, tile_t - halo_pad:]
        zero = jnp.zeros((B, C, 1, halo_pad), x.dtype)
        halos = jnp.concatenate([zero, tails], axis=2)          # (B, C, num_t, halo_pad)
    else:
        # Rare deep-dilation case: halo spans multiple tiles.
        xp = jnp.concatenate([jnp.zeros((B, C, halo_pad), x.dtype), x], axis=-1)
        halos = jnp.stack([xp[:, :, ti * tile_t: ti * tile_t + halo_pad]
                           for ti in range(num_t)], axis=2)     # (B, C, num_t, halo_pad)
    return jnp.transpose(halos, (0, 2, 1, 3))                   # (B, num_t, C, halo_pad)


def _make_block_kernel(K, dilation, tile_t, pad, halo_pad, has_downsample, compute_dtype):
    """Fused TemporalBlock: relu(conv1) -> relu(conv2) -> relu(+residual), one grid step
    per (batch, time-tile)."""
    W1 = pad + tile_t                 # conv1 is computed over tile_t + pad columns
    off = halo_pad - 2 * pad          # start of the valid x window inside the scratch

    def kernel(*refs):
        if pad > 0:
            if has_downsample:
                (x_ref, h_ref, w1_ref, b1_ref, w2_ref, b2_ref,
                 wd_ref, bd_ref, o_ref, win_ref) = refs
            else:
                x_ref, h_ref, w1_ref, b1_ref, w2_ref, b2_ref, o_ref, win_ref = refs
            # Assemble the conv1 input window [t0 - 2*pad, t0 + tile_t) in VMEM with two
            # stores (the x-tile store is lane-aligned when halo_pad % 128 == 0).
            win_ref[:, :halo_pad] = h_ref[...]
            win_ref[:, halo_pad:] = x_ref[...]

            def win_slice(s, w):
                return win_ref[:, s:s + w]
        else:
            if has_downsample:
                x_ref, w1_ref, b1_ref, w2_ref, b2_ref, wd_ref, bd_ref, o_ref = refs
            else:
                x_ref, w1_ref, b1_ref, w2_ref, b2_ref, o_ref = refs

            def win_slice(s, w):
                return x_ref[:, s:s + w]

        # ---- conv1 (causal dilated): K-tap MXU accumulation over shifted window slices.
        acc1 = jnp.dot(w1_ref[0], win_slice(off, W1),
                       preferred_element_type=jnp.float32)
        for j in range(1, K):
            acc1 = acc1 + jnp.dot(w1_ref[j], win_slice(off + j * dilation, W1),
                                  preferred_element_type=jnp.float32)
        h1 = jnp.maximum(acc1 + b1_ref[...], 0.0)                # (Cout, W1) f32

        if pad > 0:
            # PyTorch zero-pads conv2's input: recomputed conv1 columns at global t < 0
            # must be zero, not relu(b1).  Column i <-> t = ti*tile_t - pad + i.
            thresh = pad - pl.program_id(1) * tile_t
            lane = jax.lax.broadcasted_iota(jnp.int32, h1.shape, 1)
            h1 = jnp.where(lane >= thresh, h1, 0.0)
        h1 = h1.astype(compute_dtype)

        # ---- conv2 over the tile's tile_t columns; its causal halo is h1[:, :pad].
        acc2 = jnp.dot(w2_ref[0], h1[:, 0:tile_t],
                       preferred_element_type=jnp.float32)
        for j in range(1, K):
            acc2 = acc2 + jnp.dot(w2_ref[j], h1[:, j * dilation:j * dilation + tile_t],
                                  preferred_element_type=jnp.float32)
        out = jnp.maximum(acc2 + b2_ref[...], 0.0)               # (Cout, tile_t) f32

        # ---- residual (identity or fused 1x1 downsample conv) + final ReLU.
        if has_downsample:
            res = jnp.dot(wd_ref[...], x_ref[...],
                          preferred_element_type=jnp.float32) + bd_ref[...]
        else:
            res = x_ref[...].astype(jnp.float32)
        o_ref[...] = jnp.maximum(out + res, 0.0).astype(o_ref.dtype)

    return kernel


def temporal_block(x, w1, b1, w2, b2, dilation, *, downsample=None,
                   compute_dtype=jnp.bfloat16):
    """One fused TemporalBlock forward:  relu(relu(conv2(relu(conv1(x)))) + res).

    x: (B, Cin, T);  w1: (Cout, Cin, K);  w2: (Cout, Cout, K);  b1, b2: (Cout,)
    downsample: optional (wd (Cout, Cin, 1), bd (Cout,)); identity residual otherwise.
    Returns (B, Cout, T) in compute_dtype.
    """
    B, Cin, T = x.shape
    Cout, Cin_w, K = w1.shape
    assert Cin_w == Cin
    act_bytes = jnp.dtype(compute_dtype).itemsize
    budget = _vmem_budget_bytes()
    tile_t, halo_pad, pad = _pick_tiling(T, B, Cin, Cout, K, dilation, act_bytes, budget)
    assert T % tile_t == 0
    num_t = T // tile_t

    x_c = x.astype(compute_dtype)
    w1_k = jnp.transpose(w1, (2, 0, 1)).astype(compute_dtype)    # (K, Cout, Cin)
    w2_k = jnp.transpose(w2, (2, 0, 1)).astype(compute_dtype)    # (K, Cout, Cout)
    b1_2 = b1.reshape(Cout, 1).astype(jnp.float32)
    b2_2 = b2.reshape(Cout, 1).astype(jnp.float32)

    inputs = [x_c]
    in_specs = [pl.BlockSpec((None, Cin, tile_t), lambda bi, ti: (bi, 0, ti))]

    if pad > 0:
        halos = _build_halos(x_c, halo_pad, tile_t)              # (B, num_t, Cin, halo_pad)
        inputs.append(halos)
        in_specs.append(pl.BlockSpec((None, None, Cin, halo_pad),
                                     lambda bi, ti: (bi, ti, 0, 0)))

    # Weight / bias index_maps are independent of (bi, ti): blocks stay VMEM-resident.
    inputs += [w1_k, b1_2, w2_k, b2_2]
    in_specs += [
        pl.BlockSpec((K, Cout, Cin), lambda bi, ti: (0, 0, 0)),
        pl.BlockSpec((Cout, 1), lambda bi, ti: (0, 0)),
        pl.BlockSpec((K, Cout, Cout), lambda bi, ti: (0, 0, 0)),
        pl.BlockSpec((Cout, 1), lambda bi, ti: (0, 0)),
    ]

    has_downsample = downsample is not None
    if has_downsample:
        wd, bd = downsample
        inputs += [wd[:, :, 0].astype(compute_dtype),            # (Cout, Cin)
                   bd.reshape(Cout, 1).astype(jnp.float32)]
        in_specs += [pl.BlockSpec((Cout, Cin), lambda bi, ti: (0, 0)),
                     pl.BlockSpec((Cout, 1), lambda bi, ti: (0, 0))]
    else:
        assert Cin == Cout, "identity residual requires Cin == Cout"

    scratch = []
    if pad > 0:
        scratch.append(pltpu.VMEM((Cin, halo_pad + tile_t), compute_dtype))

    return pl.pallas_call(
        _make_block_kernel(K, dilation, tile_t, pad, halo_pad, has_downsample,
                           compute_dtype),
        out_shape=jax.ShapeDtypeStruct((B, Cout, T), compute_dtype),
        grid=(B, num_t),
        in_specs=in_specs,
        out_specs=pl.BlockSpec((None, Cout, tile_t), lambda bi, ti: (bi, 0, ti)),
        scratch_shapes=scratch,
        compiler_params=pltpu.CompilerParams(
            dimension_semantics=("parallel", "parallel"),
            vmem_limit_bytes=budget),
    )(*inputs)


def weight_norm_effective(v):
    """weight_norm(dim=0): at init weight_g = ||v|| per output channel, so the effective
    weight equals v exactly."""
    return v


def init_params(key, num_inputs, num_channels, kernel_size):
    params = []
    for i, out_ch in enumerate(num_channels):
        in_ch = num_inputs if i == 0 else num_channels[i - 1]
        key, k1, k2, k3, k4, k5, k6 = jax.random.split(key, 7)
        w1_v = 0.01 * jax.random.normal(k1, (out_ch, in_ch, kernel_size), jnp.float32)
        w2_v = 0.01 * jax.random.normal(k2, (out_ch, out_ch, kernel_size), jnp.float32)
        b1 = 0.01 * jax.random.normal(k3, (out_ch,), jnp.float32)
        b2 = 0.01 * jax.random.normal(k4, (out_ch,), jnp.float32)
        layer = {
            "w1": weight_norm_effective(w1_v),
            "b1": b1,
            "w2": weight_norm_effective(w2_v),
            "b2": b2,
            "dilation": 2 ** i,
        }
        if in_ch != out_ch:
            layer["wd"] = 0.01 * jax.random.normal(k5, (out_ch, in_ch, 1), jnp.float32)
            layer["bd"] = 0.01 * jax.random.normal(k6, (out_ch,), jnp.float32)
        params.append(layer)
    return params


def temporal_conv_net(x, params, compute_dtype=jnp.bfloat16):
    """Forward pass of TemporalConvNet. x: (B, C_in, T) float32."""
    # NOTE: inter-layer activations are stored in bf16 (HBM-bound network); error can
    # compound for very deep stacks — switch compute_dtype to f32 if that matters.
    h = x.astype(compute_dtype)
    for layer in params:
        ds = (layer["wd"], layer["bd"]) if "wd" in layer else None
        h = temporal_block(h, layer["w1"], layer["b1"], layer["w2"], layer["b2"],
                           layer["dilation"], downsample=ds, compute_dtype=compute_dtype)
    return h.astype(jnp.float32)


# ---------------- pure-JAX reference for verification ----------------
def _ref_causal_conv(x, w, b, dilation):
    B, Cin, T = x.shape
    Cout, _, K = w.shape
    pad = (K - 1) * dilation
    xp = jnp.pad(x, ((0, 0), (0, 0), (pad, 0)))
    out = jnp.zeros((B, Cout, T), jnp.float32)
    for j in range(K):
        out = out + jnp.einsum("oi,bit->bot", w[:, :, j],
                               xp[:, :, j * dilation:j * dilation + T])
    return out + b[None, :, None]


def _ref_tcn(x, params):
    h = x
    for layer in params:
        d = layer["dilation"]
        out1 = jnp.maximum(_ref_causal_conv(h, layer["w1"], layer["b1"], d), 0.0)
        out2 = jnp.maximum(_ref_causal_conv(out1, layer["w2"], layer["b2"], d), 0.0)
        res = h if "wd" not in layer else _ref_causal_conv(h, layer["wd"], layer["bd"], 1)
        h = jnp.maximum(out2 + res, 0.0)
    return h


if __name__ == "__main__":
    key = jax.random.PRNGKey(0)
    key, kx = jax.random.split(key)

    B, C_in, T = 2, 4, 16
    num_channels = [8, 8]
    kernel_size = 2

    x = jax.random.normal(kx, (B, C_in, T), jnp.float32)
    params = init_params(key, C_in, num_channels, kernel_size)

    fwd = jax.jit(lambda inp: temporal_conv_net(inp, params))
    out = jax.block_until_ready(fwd(x))

    ref = _ref_tcn(x, params)
    assert out.shape == (B, num_channels[-1], T)
    # bf16 matmul operands + bf16 inter-layer activations => slightly loose tolerance.
    assert jnp.allclose(out, ref, rtol=2e-2, atol=1e-2), "Pallas output mismatch vs reference"

    print("KERNEL_OK")
</pallas_src>

<mosaic_0001>
module attributes {stable_mosaic.version = 11 : i64} {
  func.func @kernel(%arg0: i32, %arg1: i32, %arg2: memref<1x4x16xbf16, #tpu.memory_space<vmem>>, %arg3: memref<1x1x4x2xbf16, #tpu.memory_space<vmem>>, %arg4: memref<2x8x4xbf16, #tpu.memory_space<vmem>>, %arg5: memref<8x1xf32, #tpu.memory_space<vmem>>, %arg6: memref<2x8x8xbf16, #tpu.memory_space<vmem>>, %arg7: memref<8x1xf32, #tpu.memory_space<vmem>>, %arg8: memref<8x4xbf16, #tpu.memory_space<vmem>>, %arg9: memref<8x1xf32, #tpu.memory_space<vmem>>, %arg10: memref<1x8x16xbf16, #tpu.memory_space<vmem>>, %arg11: memref<4x18xbf16, #tpu.memory_space<vmem>>) attributes {dimension_semantics = [#tpu.dimension_semantics<parallel>, #tpu.dimension_semantics<parallel>], iteration_bounds = array<i64: 2, 1>, scalar_prefetch = 0 : i64, scratch_operands = 1 : i64, tpu.core_type = #tpu.core_type<tc>, window_params = [{transform_indices = @transform_0, window_bounds = array<i64: 1, 4, 16>}, {transform_indices = @transform_1, window_bounds = array<i64: 1, 1, 4, 2>}, {pipeline_mode = #tpu.pipeline_mode<synchronous>, transform_indices = @transform_2, window_bounds = array<i64: 2, 8, 4>}, {pipeline_mode = #tpu.pipeline_mode<synchronous>, transform_indices = @transform_3, window_bounds = array<i64: 8, 1>}, {pipeline_mode = #tpu.pipeline_mode<synchronous>, transform_indices = @transform_4, window_bounds = array<i64: 2, 8, 8>}, {pipeline_mode = #tpu.pipeline_mode<synchronous>, transform_indices = @transform_5, window_bounds = array<i64: 8, 1>}, {pipeline_mode = #tpu.pipeline_mode<synchronous>, transform_indices = @transform_6, window_bounds = array<i64: 8, 4>}, {pipeline_mode = #tpu.pipeline_mode<synchronous>, transform_indices = @transform_7, window_bounds = array<i64: 8, 1>}, {transform_indices = @transform_8, window_bounds = array<i64: 1, 8, 16>}]} {
    %c0 = arith.constant 0 : index
    %c0_0 = arith.constant 0 : index
    %c0_1 = arith.constant 0 : index
    %c0_2 = arith.constant 0 : index
    %0 = vector.load %arg3[%c0, %c0_0, %c0_1, %c0_2] : memref<1x1x4x2xbf16, #tpu.memory_space<vmem>>, vector<1x1x4x2xbf16>
    %1 = vector.shape_cast %0 : vector<1x1x4x2xbf16> to vector<4x2xbf16>
    %c0_3 = arith.constant 0 : index
    %c0_4 = arith.constant 0 : index
    %2 = vector.load %arg11[%c0_3, %c0_4] : memref<4x18xbf16, #tpu.memory_space<vmem>>, vector<4x2xbf16>
    tpu.vector_store %arg11[%c0_3, %c0_4], %1 {strides = array<i32>} : memref<4x18xbf16, #tpu.memory_space<vmem>>, vector<4x2xbf16>,
    %c0_5 = arith.constant 0 : index
    %c0_6 = arith.constant 0 : index
    %c0_7 = arith.constant 0 : index
    %3 = vector.load %arg2[%c0_5, %c0_6, %c0_7] : memref<1x4x16xbf16, #tpu.memory_space<vmem>>, vector<1x4x16xbf16>
    %4 = vector.shape_cast %3 : vector<1x4x16xbf16> to vector<4x16xbf16>
    %c0_8 = arith.constant 0 : index
    %c2 = arith.constant 2 : index
    %5 = vector.load %arg11[%c0_8, %c2] : memref<4x18xbf16, #tpu.memory_space<vmem>>, vector<4x16xbf16>
    tpu.vector_store %arg11[%c0_8, %c2], %4 {strides = array<i32>} : memref<4x18xbf16, #tpu.memory_space<vmem>>, vector<4x16xbf16>,
    %c0_9 = arith.constant 0 : index
    %c0_10 = arith.constant 0 : index
    %c0_11 = arith.constant 0 : index
    %6 = vector.load %arg4[%c0_9, %c0_10, %c0_11] : memref<2x8x4xbf16, #tpu.memory_space<vmem>>, vector<1x8x4xbf16>
    %7 = vector.shape_cast %6 : vector<1x8x4xbf16> to vector<8x4xbf16>
    %c0_12 = arith.constant 0 : index
    %c0_13 = arith.constant 0 : index
    %8 = vector.load %arg11[%c0_12, %c0_13] : memref<4x18xbf16, #tpu.memory_space<vmem>>, vector<4x17xbf16>
    %cst = arith.constant dense<0.000000e+00> : vector<8x17xf32>
    %9 = tpu.matmul %7, %8, %cst {dimension_numbers = #tpu.dot_dimension_numbers<[1], [0], [0], [1], [0, 0, 1, 1], [], []>} : vector<8x4xbf16>, vector<4x17xbf16>, vector<8x17xf32> -> vector<8x17xf32>
    %c1 = arith.constant 1 : index
    %c0_14 = arith.constant 0 : index
    %c0_15 = arith.constant 0 : index
    %10 = vector.load %arg4[%c1, %c0_14, %c0_15] : memref<2x8x4xbf16, #tpu.memory_space<vmem>>, vector<1x8x4xbf16>
    %11 = vector.shape_cast %10 : vector<1x8x4xbf16> to vector<8x4xbf16>
    %c0_16 = arith.constant 0 : index
    %c1_17 = arith.constant 1 : index
    %12 = vector.load %arg11[%c0_16, %c1_17] : memref<4x18xbf16, #tpu.memory_space<vmem>>, vector<4x17xbf16>
    %cst_18 = arith.constant dense<0.000000e+00> : vector<8x17xf32>
    %13 = tpu.matmul %11, %12, %cst_18 {dimension_numbers = #tpu.dot_dimension_numbers<[1], [0], [0], [1], [0, 0, 1, 1], [], []>} : vector<8x4xbf16>, vector<4x17xbf16>, vector<8x17xf32> -> vector<8x17xf32>
    %14 = arith.addf %9, %13 : vector<8x17xf32>
    %c0_19 = arith.constant 0 : index
    %c0_20 = arith.constant 0 : index
    %15 = vector.load %arg5[%c0_19, %c0_20] : memref<8x1xf32, #tpu.memory_space<vmem>>, vector<8x1xf32>
    %16 = vector.broadcast %15 : vector<8x1xf32> to vector<8x17xf32>
    %17 = arith.addf %14, %16 : vector<8x17xf32>
    %cst_21 = arith.constant 0.000000e+00 : f32
    %18 = vector.broadcast %cst_21 : f32 to vector<8x17xf32>
    %19 = arith.maximumf %17, %18 : vector<8x17xf32>
    %c16_i32 = arith.constant 16 : i32
    %20 = arith.muli %arg1, %c16_i32 : i32
    %c1_i32 = arith.constant 1 : i32
    %21 = arith.subi %c1_i32, %20 : i32
    %22 = tpu.iota {dimensions = array<i32: 1>} : vector<8x17xi32>
    %23 = vector.broadcast %21 : i32 to vector<8x17xi32>
    %24 = arith.cmpi sge, %22, %23 : vector<8x17xi32>
    %cst_22 = arith.constant 0.000000e+00 : f32
    %25 = vector.broadcast %cst_22 : f32 to vector<8x17xf32>
    %26 = arith.select %24, %19, %25 : vector<8x17xi1>, vector<8x17xf32>
    %27 = arith.truncf %26 : vector<8x17xf32> to vector<8x17xbf16>
    %c0_23 = arith.constant 0 : index
    %c0_24 = arith.constant 0 : index
    %c0_25 = arith.constant 0 : index
    %28 = vector.load %arg6[%c0_23, %c0_24, %c0_25] : memref<2x8x8xbf16, #tpu.memory_space<vmem>>, vector<1x8x8xbf16>
    %29 = vector.shape_cast %28 : vector<1x8x8xbf16> to vector<8x8xbf16>
    %30 = vector.extract_strided_slice %27 {offsets = [0, 0], sizes = [8, 16], strides = [1, 1]} : vector<8x17xbf16> to vector<8x16xbf16>
    %cst_26 = arith.constant dense<0.000000e+00> : vector<8x16xf32>
    %31 = tpu.matmul %29, %30, %cst_26 {dimension_numbers = #tpu.dot_dimension_numbers<[1], [0], [0], [1], [0, 0, 1, 1], [], []>} : vector<8x8xbf16>, vector<8x16xbf16>, vector<8x16xf32> -> vector<8x16xf32>
    %c1_27 = arith.constant 1 : index
    %c0_28 = arith.constant 0 : index
    %c0_29 = arith.constant 0 : index
    %32 = vector.load %arg6[%c1_27, %c0_28, %c0_29] : memref<2x8x8xbf16, #tpu.memory_space<vmem>>, vector<1x8x8xbf16>
    %33 = vector.shape_cast %32 : vector<1x8x8xbf16> to vector<8x8xbf16>
    %34 = vector.extract_strided_slice %27 {offsets = [0, 1], sizes = [8, 16], strides = [1, 1]} : vector<8x17xbf16> to vector<8x16xbf16>
    %cst_30 = arith.constant dense<0.000000e+00> : vector<8x16xf32>
    %35 = tpu.matmul %33, %34, %cst_30 {dimension_numbers = #tpu.dot_dimension_numbers<[1], [0], [0], [1], [0, 0, 1, 1], [], []>} : vector<8x8xbf16>, vector<8x16xbf16>, vector<8x16xf32> -> vector<8x16xf32>
    %36 = arith.addf %31, %35 : vector<8x16xf32>
    %c0_31 = arith.constant 0 : index
    %c0_32 = arith.constant 0 : index
    %37 = vector.load %arg7[%c0_31, %c0_32] : memref<8x1xf32, #tpu.memory_space<vmem>>, vector<8x1xf32>
    %38 = vector.broadcast %37 : vector<8x1xf32> to vector<8x16xf32>
    %39 = arith.addf %36, %38 : vector<8x16xf32>
    %cst_33 = arith.constant 0.000000e+00 : f32
    %40 = vector.broadcast %cst_33 : f32 to vector<8x16xf32>
    %41 = arith.maximumf %39, %40 : vector<8x16xf32>
    %c0_34 = arith.constant 0 : index
    %c0_35 = arith.constant 0 : index
    %42 = vector.load %arg8[%c0_34, %c0_35] : memref<8x4xbf16, #tpu.memory_space<vmem>>, vector<8x4xbf16>
    %c0_36 = arith.constant 0 : index
    %c0_37 = arith.constant 0 : index
    %c0_38 = arith.constant 0 : index
    %43 = vector.load %arg2[%c0_36, %c0_37, %c0_38] : memref<1x4x16xbf16, #tpu.memory_space<vmem>>, vector<1x4x16xbf16>
    %44 = vector.shape_cast %43 : vector<1x4x16xbf16> to vector<4x16xbf16>
    %cst_39 = arith.constant dense<0.000000e+00> : vector<8x16xf32>
    %45 = tpu.matmul %42, %44, %cst_39 {dimension_numbers = #tpu.dot_dimension_numbers<[1], [0], [0], [1], [0, 0, 1, 1], [], []>} : vector<8x4xbf16>, vector<4x16xbf16>, vector<8x16xf32> -> vector<8x16xf32>
    %c0_40 = arith.constant 0 : index
    %c0_41 = arith.constant 0 : index
    %46 = vector.load %arg9[%c0_40, %c0_41] : memref<8x1xf32, #tpu.memory_space<vmem>>, vector<8x1xf32>
    %47 = vector.broadcast %46 : vector<8x1xf32> to vector<8x16xf32>
    %48 = arith.addf %45, %47 : vector<8x16xf32>
    %49 = arith.addf %41, %48 : vector<8x16xf32>
    %cst_42 = arith.constant 0.000000e+00 : f32
    %50 = vector.broadcast %cst_42 : f32 to vector<8x16xf32>
    %51 = arith.maximumf %49, %50 : vector<8x16xf32>
    %52 = arith.truncf %51 : vector<8x16xf32> to vector<8x16xbf16>
    %c0_43 = arith.constant 0 : index
    %c0_44 = arith.constant 0 : index
    %c0_45 = arith.constant 0 : index
    %53 = vector.load %arg10[%c0_43, %c0_44, %c0_45] : memref<1x8x16xbf16, #tpu.memory_space<vmem>>, vector<1x8x16xbf16>
    %54 = vector.shape_cast %53 : vector<1x8x16xbf16> to vector<8x16xbf16>
    %55 = vector.shape_cast %52 : vector<8x16xbf16> to vector<1x8x16xbf16>
    tpu.vector_store %arg10[%c0_43, %c0_44, %c0_45], %55 {strides = array<i32>} : memref<1x8x16xbf16, #tpu.memory_space<vmem>>, vector<1x8x16xbf16>,
    return
  }
  func.func @transform_0(%arg0: i32, %arg1: i32) -> (i32, i32, i32) {
    %c0_i32 = arith.constant 0 : i32
    %c0_i32_0 = arith.constant 0 : i32
    return %arg0, %c0_i32, %arg1 : i32, i32, i32
  }
  func.func @transform_1(%arg0: i32, %arg1: i32) -> (i32, i32, i32, i32) {
    %c0_i32 = arith.constant 0 : i32
    %c0_i32_0 = arith.constant 0 : i32
    %c0_i32_1 = arith.constant 0 : i32
    return %arg0, %arg1, %c0_i32, %c0_i32_0 : i32, i32, i32, i32
  }
  func.func @transform_2(%arg0: i32, %arg1: i32) -> (i32, i32, i32) {
    %c0_i32 = arith.constant 0 : i32
    %c0_i32_0 = arith.constant 0 : i32
    %c0_i32_1 = arith.constant 0 : i32
    %c0_i32_2 = arith.constant 0 : i32
    return %c0_i32, %c0_i32_0, %c0_i32_1 : i32, i32, i32
  }
  func.func @transform_3(%arg0: i32, %arg1: i32) -> (i32, i32) {
    %c0_i32 = arith.constant 0 : i32
    %c0_i32_0 = arith.constant 0 : i32
    %c0_i32_1 = arith.constant 0 : i32
    return %c0_i32, %c0_i32_0 : i32, i32
  }
  func.func @transform_4(%arg0: i32, %arg1: i32) -> (i32, i32, i32) {
    %c0_i32 = arith.constant 0 : i32
    %c0_i32_0 = arith.constant 0 : i32
    %c0_i32_1 = arith.constant 0 : i32
    %c0_i32_2 = arith.constant 0 : i32
    return %c0_i32, %c0_i32_0, %c0_i32_1 : i32, i32, i32
  }
  func.func @transform_5(%arg0: i32, %arg1: i32) -> (i32, i32) {
    %c0_i32 = arith.constant 0 : i32
    %c0_i32_0 = arith.constant 0 : i32
    %c0_i32_1 = arith.constant 0 : i32
    return %c0_i32, %c0_i32_0 : i32, i32
  }
  func.func @transform_6(%arg0: i32, %arg1: i32) -> (i32, i32) {
    %c0_i32 = arith.constant 0 : i32
    %c0_i32_0 = arith.constant 0 : i32
    %c0_i32_1 = arith.constant 0 : i32
    return %c0_i32, %c0_i32_0 : i32, i32
  }
  func.func @transform_7(%arg0: i32, %arg1: i32) -> (i32, i32) {
    %c0_i32 = arith.constant 0 : i32
    %c0_i32_0 = arith.constant 0 : i32
    %c0_i32_1 = arith.constant 0 : i32
    return %c0_i32, %c0_i32_0 : i32, i32
  }
  func.func @transform_8(%arg0: i32, %arg1: i32) -> (i32, i32, i32) {
    %c0_i32 = arith.constant 0 : i32
    %c0_i32_0 = arith.constant 0 : i32
    return %arg0, %c0_i32, %arg1 : i32, i32, i32
  }
}

module attributes {stable_mosaic.version = 11 : i64} {
  func.func @kernel(%arg0: i32, %arg1: i32, %arg2: memref<1x8x16xbf16, #tpu.memory_space<vmem>>, %arg3: memref<1x1x8x4xbf16, #tpu.memory_space<vmem>>, %arg4: memref<2x8x8xbf16, #tpu.memory_space<vmem>>, %arg5: memref<8x1xf32, #tpu.memory_space<vmem>>, %arg6: memref<2x8x8xbf16, #tpu.memory_space<vmem>>, %arg7: memref<8x1xf32, #tpu.memory_space<vmem>>, %arg8: memref<1x8x16xbf16, #tpu.memory_space<vmem>>, %arg9: memref<8x20xbf16, #tpu.memory_space<vmem>>) attributes {dimension_semantics = [#tpu.dimension_semantics<parallel>, #tpu.dimension_semantics<parallel>], iteration_bounds = array<i64: 2, 1>, scalar_prefetch = 0 : i64, scratch_operands = 1 : i64, tpu.core_type = #tpu.core_type<tc>, window_params = [{transform_indices = @transform_0, window_bounds = array<i64: 1, 8, 16>}, {transform_indices = @transform_1, window_bounds = array<i64: 1, 1, 8, 4>}, {pipeline_mode = #tpu.pipeline_mode<synchronous>, transform_indices = @transform_2, window_bounds = array<i64: 2, 8, 8>}, {pipeline_mode = #tpu.pipeline_mode<synchronous>, transform_indices = @transform_3, window_bounds = array<i64: 8, 1>}, {pipeline_mode = #tpu.pipeline_mode<synchronous>, transform_indices = @transform_4, window_bounds = array<i64: 2, 8, 8>}, {pipeline_mode = #tpu.pipeline_mode<synchronous>, transform_indices = @transform_5, window_bounds = array<i64: 8, 1>}, {transform_indices = @transform_6, window_bounds = array<i64: 1, 8, 16>}]} {
    %c0 = arith.constant 0 : index
    %c0_0 = arith.constant 0 : index
    %c0_1 = arith.constant 0 : index
    %c0_2 = arith.constant 0 : index
    %0 = vector.load %arg3[%c0, %c0_0, %c0_1, %c0_2] : memref<1x1x8x4xbf16, #tpu.memory_space<vmem>>, vector<1x1x8x4xbf16>
    %1 = vector.shape_cast %0 : vector<1x1x8x4xbf16> to vector<8x4xbf16>
    %c0_3 = arith.constant 0 : index
    %c0_4 = arith.constant 0 : index
    %2 = vector.load %arg9[%c0_3, %c0_4] : memref<8x20xbf16, #tpu.memory_space<vmem>>, vector<8x4xbf16>
    tpu.vector_store %arg9[%c0_3, %c0_4], %1 {strides = array<i32>} : memref<8x20xbf16, #tpu.memory_space<vmem>>, vector<8x4xbf16>,
    %c0_5 = arith.constant 0 : index
    %c0_6 = arith.constant 0 : index
    %c0_7 = arith.constant 0 : index
    %3 = vector.load %arg2[%c0_5, %c0_6, %c0_7] : memref<1x8x16xbf16, #tpu.memory_space<vmem>>, vector<1x8x16xbf16>
    %4 = vector.shape_cast %3 : vector<1x8x16xbf16> to vector<8x16xbf16>
    %c0_8 = arith.constant 0 : index
    %c4 = arith.constant 4 : index
    %5 = vector.load %arg9[%c0_8, %c4] : memref<8x20xbf16, #tpu.memory_space<vmem>>, vector<8x16xbf16>
    tpu.vector_store %arg9[%c0_8, %c4], %4 {strides = array<i32>} : memref<8x20xbf16, #tpu.memory_space<vmem>>, vector<8x16xbf16>,
    %c0_9 = arith.constant 0 : index
    %c0_10 = arith.constant 0 : index
    %c0_11 = arith.constant 0 : index
    %6 = vector.load %arg4[%c0_9, %c0_10, %c0_11] : memref<2x8x8xbf16, #tpu.memory_space<vmem>>, vector<1x8x8xbf16>
    %7 = vector.shape_cast %6 : vector<1x8x8xbf16> to vector<8x8xbf16>
    %c0_12 = arith.constant 0 : index
    %c0_13 = arith.constant 0 : index
    %8 = vector.load %arg9[%c0_12, %c0_13] : memref<8x20xbf16, #tpu.memory_space<vmem>>, vector<8x18xbf16>
    %cst = arith.constant dense<0.000000e+00> : vector<8x18xf32>
    %9 = tpu.matmul %7, %8, %cst {dimension_numbers = #tpu.dot_dimension_numbers<[1], [0], [0], [1], [0, 0, 1, 1], [], []>} : vector<8x8xbf16>, vector<8x18xbf16>, vector<8x18xf32> -> vector<8x18xf32>
    %c1 = arith.constant 1 : index
    %c0_14 = arith.constant 0 : index
    %c0_15 = arith.constant 0 : index
    %10 = vector.load %arg4[%c1, %c0_14, %c0_15] : memref<2x8x8xbf16, #tpu.memory_space<vmem>>, vector<1x8x8xbf16>
    %11 = vector.shape_cast %10 : vector<1x8x8xbf16> to vector<8x8xbf16>
    %c0_16 = arith.constant 0 : index
    %c2 = arith.constant 2 : index
    %12 = vector.load %arg9[%c0_16, %c2] : memref<8x20xbf16, #tpu.memory_space<vmem>>, vector<8x18xbf16>
    %cst_17 = arith.constant dense<0.000000e+00> : vector<8x18xf32>
    %13 = tpu.matmul %11, %12, %cst_17 {dimension_numbers = #tpu.dot_dimension_numbers<[1], [0], [0], [1], [0, 0, 1, 1], [], []>} : vector<8x8xbf16>, vector<8x18xbf16>, vector<8x18xf32> -> vector<8x18xf32>
    %14 = arith.addf %9, %13 : vector<8x18xf32>
    %c0_18 = arith.constant 0 : index
    %c0_19 = arith.constant 0 : index
    %15 = vector.load %arg5[%c0_18, %c0_19] : memref<8x1xf32, #tpu.memory_space<vmem>>, vector<8x1xf32>
    %16 = vector.broadcast %15 : vector<8x1xf32> to vector<8x18xf32>
    %17 = arith.addf %14, %16 : vector<8x18xf32>
    %cst_20 = arith.constant 0.000000e+00 : f32
    %18 = vector.broadcast %cst_20 : f32 to vector<8x18xf32>
    %19 = arith.maximumf %17, %18 : vector<8x18xf32>
    %c16_i32 = arith.constant 16 : i32
    %20 = arith.muli %arg1, %c16_i32 : i32
    %c2_i32 = arith.constant 2 : i32
    %21 = arith.subi %c2_i32, %20 : i32
    %22 = tpu.iota {dimensions = array<i32: 1>} : vector<8x18xi32>
    %23 = vector.broadcast %21 : i32 to vector<8x18xi32>
    %24 = arith.cmpi sge, %22, %23 : vector<8x18xi32>
    %cst_21 = arith.constant 0.000000e+00 : f32
    %25 = vector.broadcast %cst_21 : f32 to vector<8x18xf32>
    %26 = arith.select %24, %19, %25 : vector<8x18xi1>, vector<8x18xf32>
    %27 = arith.truncf %26 : vector<8x18xf32> to vector<8x18xbf16>
    %c0_22 = arith.constant 0 : index
    %c0_23 = arith.constant 0 : index
    %c0_24 = arith.constant 0 : index
    %28 = vector.load %arg6[%c0_22, %c0_23, %c0_24] : memref<2x8x8xbf16, #tpu.memory_space<vmem>>, vector<1x8x8xbf16>
    %29 = vector.shape_cast %28 : vector<1x8x8xbf16> to vector<8x8xbf16>
    %30 = vector.extract_strided_slice %27 {offsets = [0, 0], sizes = [8, 16], strides = [1, 1]} : vector<8x18xbf16> to vector<8x16xbf16>
    %cst_25 = arith.constant dense<0.000000e+00> : vector<8x16xf32>
    %31 = tpu.matmul %29, %30, %cst_25 {dimension_numbers = #tpu.dot_dimension_numbers<[1], [0], [0], [1], [0, 0, 1, 1], [], []>} : vector<8x8xbf16>, vector<8x16xbf16>, vector<8x16xf32> -> vector<8x16xf32>
    %c1_26 = arith.constant 1 : index
    %c0_27 = arith.constant 0 : index
    %c0_28 = arith.constant 0 : index
    %32 = vector.load %arg6[%c1_26, %c0_27, %c0_28] : memref<2x8x8xbf16, #tpu.memory_space<vmem>>, vector<1x8x8xbf16>
    %33 = vector.shape_cast %32 : vector<1x8x8xbf16> to vector<8x8xbf16>
    %34 = vector.extract_strided_slice %27 {offsets = [0, 2], sizes = [8, 16], strides = [1, 1]} : vector<8x18xbf16> to vector<8x16xbf16>
    %cst_29 = arith.constant dense<0.000000e+00> : vector<8x16xf32>
    %35 = tpu.matmul %33, %34, %cst_29 {dimension_numbers = #tpu.dot_dimension_numbers<[1], [0], [0], [1], [0, 0, 1, 1], [], []>} : vector<8x8xbf16>, vector<8x16xbf16>, vector<8x16xf32> -> vector<8x16xf32>
    %36 = arith.addf %31, %35 : vector<8x16xf32>
    %c0_30 = arith.constant 0 : index
    %c0_31 = arith.constant 0 : index
    %37 = vector.load %arg7[%c0_30, %c0_31] : memref<8x1xf32, #tpu.memory_space<vmem>>, vector<8x1xf32>
    %38 = vector.broadcast %37 : vector<8x1xf32> to vector<8x16xf32>
    %39 = arith.addf %36, %38 : vector<8x16xf32>
    %cst_32 = arith.constant 0.000000e+00 : f32
    %40 = vector.broadcast %cst_32 : f32 to vector<8x16xf32>
    %41 = arith.maximumf %39, %40 : vector<8x16xf32>
    %c0_33 = arith.constant 0 : index
    %c0_34 = arith.constant 0 : index
    %c0_35 = arith.constant 0 : index
    %42 = vector.load %arg2[%c0_33, %c0_34, %c0_35] : memref<1x8x16xbf16, #tpu.memory_space<vmem>>, vector<1x8x16xbf16>
    %43 = vector.shape_cast %42 : vector<1x8x16xbf16> to vector<8x16xbf16>
    %44 = arith.extf %43 : vector<8x16xbf16> to vector<8x16xf32>
    %45 = arith.addf %41, %44 : vector<8x16xf32>
    %cst_36 = arith.constant 0.000000e+00 : f32
    %46 = vector.broadcast %cst_36 : f32 to vector<8x16xf32>
    %47 = arith.maximumf %45, %46 : vector<8x16xf32>
    %48 = arith.truncf %47 : vector<8x16xf32> to vector<8x16xbf16>
    %c0_37 = arith.constant 0 : index
    %c0_38 = arith.constant 0 : index
    %c0_39 = arith.constant 0 : index
    %49 = vector.load %arg8[%c0_37, %c0_38, %c0_39] : memref<1x8x16xbf16, #tpu.memory_space<vmem>>, vector<1x8x16xbf16>
    %50 = vector.shape_cast %49 : vector<1x8x16xbf16> to vector<8x16xbf16>
    %51 = vector.shape_cast %48 : vector<8x16xbf16> to vector<1x8x16xbf16>
    tpu.vector_store %arg8[%c0_37, %c0_38, %c0_39], %51 {strides = array<i32>} : memref<1x8x16xbf16, #tpu.memory_space<vmem>>, vector<1x8x16xbf16>,
    return
  }
  func.func @transform_0(%arg0: i32, %arg1: i32) -> (i32, i32, i32) {
    %c0_i32 = arith.constant 0 : i32
    %c0_i32_0 = arith.constant 0 : i32
    return %arg0, %c0_i32, %arg1 : i32, i32, i32
  }
  func.func @transform_1(%arg0: i32, %arg1: i32) -> (i32, i32, i32, i32) {
    %c0_i32 = arith.constant 0 : i32
    %c0_i32_0 = arith.constant 0 : i32
    %c0_i32_1 = arith.constant 0 : i32
    return %arg0, %arg1, %c0_i32, %c0_i32_0 : i32, i32, i32, i32
  }
  func.func @transform_2(%arg0: i32, %arg1: i32) -> (i32, i32, i32) {
    %c0_i32 = arith.constant 0 : i32
    %c0_i32_0 = arith.constant 0 : i32
    %c0_i32_1 = arith.constant 0 : i32
    %c0_i32_2 = arith.constant 0 : i32
    return %c0_i32, %c0_i32_0, %c0_i32_1 : i32, i32, i32
  }
  func.func @transform_3(%arg0: i32, %arg1: i32) -> (i32, i32) {
    %c0_i32 = arith.constant 0 : i32
    %c0_i32_0 = arith.constant 0 : i32
    %c0_i32_1 = arith.constant 0 : i32
    return %c0_i32, %c0_i32_0 : i32, i32
  }
  func.func @transform_4(%arg0: i32, %arg1: i32) -> (i32, i32, i32) {
    %c0_i32 = arith.constant 0 : i32
    %c0_i32_0 = arith.constant 0 : i32
    %c0_i32_1 = arith.constant 0 : i32
    %c0_i32_2 = arith.constant 0 : i32
    return %c0_i32, %c0_i32_0, %c0_i32_1 : i32, i32, i32
  }
  func.func @transform_5(%arg0: i32, %arg1: i32) -> (i32, i32) {
    %c0_i32 = arith.constant 0 : i32
    %c0_i32_0 = arith.constant 0 : i32
    %c0_i32_1 = arith.constant 0 : i32
    return %c0_i32, %c0_i32_0 : i32, i32
  }
  func.func @transform_6(%arg0: i32, %arg1: i32) -> (i32, i32, i32) {
    %c0_i32 = arith.constant 0 : i32
    %c0_i32_0 = arith.constant 0 : i32
    return %arg0, %c0_i32, %arg1 : i32, i32, i32
  }
}

</mosaic_0001>

<llo_original>
// kernel: _lambda_.2
$region0: #{_lambda_.2}
  #allocation0 [shape = 'u32[]', space=smem, size = 0x4, offset = 0x4, fixed_abs, tag = 'smem constant byte address 0x4 - core index']
  #allocation1 [shape = 'u32[144,128]{1,0:T(1,128)}', space=vmem, size = 0x12000, scoped, tag = 'internal scratch']
  #allocation2 [shape = 'bf16[4,18]{1,0:T(4,128)(2,1)}', space=vmem, size = 0x400, scoped, tag = 'scratch operand']
  %s0 = inlined_call_operand.vmem [shape: bf16[2,4,16], index: 0, kind: input, shape index: {}]
  %s1 = inlined_call_operand.vmem [shape: bf16[2,1,4,2], index: 1, kind: input, shape index: {}]
  %s2 = inlined_call_operand.vmem [shape: bf16[2,8,4], index: 2, kind: input, shape index: {}]
  %s3 = inlined_call_operand.vmem [shape: f32[8,1], index: 3, kind: input, shape index: {}]
  %s4 = inlined_call_operand.vmem [shape: bf16[2,8,8], index: 4, kind: input, shape index: {}]
  %s5 = inlined_call_operand.vmem [shape: f32[8,1], index: 5, kind: input, shape index: {}]
  %s6 = inlined_call_operand.vmem [shape: bf16[8,4], index: 6, kind: input, shape index: {}]
  %s7 = inlined_call_operand.hbm [shape: f32[8,1], index: 7, kind: input, shape index: {}]
  %s8 = inlined_call_operand.vmem [shape: bf16[2,8,16], index: 8, kind: output, shape index: {}]
  %s9 = sld [smem:[#allocation0]]
  $region69: #{_lambda_.2} parent=0
    _
  %s11 = ssub.s32 1, %s9
  %s12 = scalar_select 0, %s11, %s9
  $region1: #{_lambda_.2} parent=0
    #allocation3 [shape = 'u8[4096]{0}', space=vmem, size = 0x1000, scoped, tag = 'input window, operand 7, single buffered']
    #allocation4 [shape = 's32[2]{0}', space=sflag, size = 0x8, scoped, tag = 'scoped memory for _lambda_.2']
    %13 = vsyncpa [#allocation4], 0
    loop: start=0, step=1, limit=4
    $region2: #{_lambda_.2} parent=1 // loop_pre_header
      _
    $region3: #{_lambda_.2} parent=1 // loop_header
      %s15 = sphi 0, %s19
      %p16 = scmp.ge.s32.totalorder %s15, 4
      %s22 = sphi 0, %s34
      %s23 = sphi 0, %s30
      %s24 = sphi 0, %s22
      %s25 = sphi 0, %s23
      %s26 = sphi 0, %s24
      %s27 = sphi 0, %s25
      %s39 = sphi 0, %s41
      %s42 = sphi 0, %s39
      %s43 = sphi 0, %s42
      %s59 = sphi 0, %s43
      %s67 = sphi 0, %s69
      %s70 = sphi 0, %s67
      %s71 = sphi 0, %s70
      %s87 = sphi 0, %s71
      %s91 = sphi 0, %s91
      %s93 = sphi 0, %s91
      %s94 = sphi 0, %s93
      %s108 = sphi 0, %s94
      %s112 = sphi 0, %s112
      %s114 = sphi 0, %s112
      %s115 = sphi 0, %s114
      %s129 = sphi 0, %s115
      %s133 = sphi 0, %s133
      %s135 = sphi 0, %s133
      %s136 = sphi 0, %s135
      %s150 = sphi 0, %s136
      %s154 = sphi 0, %s154
      %s156 = sphi 0, %s154
      %s157 = sphi 0, %s156
      %s171 = sphi 0, %s157
      %s175 = sphi 0, %s175
      %s177 = sphi 0, %s175
      %s178 = sphi 0, %s177
      %s192 = sphi 0, %s178
      %s196 = sphi 0, %s196
      %s198 = sphi 0, %s196
      %s199 = sphi 0, %s198
      %s213 = sphi 0, %s199
      %s221 = sphi 0, %s223
      %s224 = sphi 0, %s221
      %s225 = sphi 0, %s224
      %s241 = sphi 0, %s225
    $region4: #{_lambda_.2} parent=1 // loop_header_branch
      %18 = sbr.rel (%p16) target = $region8
    $region5: #{_lambda_.2} parent=1 // loop_body
      %s20 = ssub.s32 %s15, 1
      %s21 = ssub.s32 %s15, 2
      %s28 = sadd.s32 1, %s23
      %p29 = scmp.ge.s32.totalorder %s28, 1
      %s30 = scalar_select %p29, 0, %s28
      %s31 = sadd.s32 1, %s22
      %s32 = scalar_select %p29, %s31, %s22
      %p33 = scmp.ge.s32.totalorder %s32, 2
      %s34 = scalar_select %p33, 0, %s32
      %s35 = ssub.s32 %s22, %s34
      %s36 = ssub.s32 %s23, %s30
      %s37 = sor.u32 %s35, %s36
      %p38 = scmp.eq.s32.totalorder %s37, 0
      %s40 = sadd.s32 %s39, 1
      %s41 = scalar_select %p38, %s39, %s40
      %p44 = pneg %p38
      %p45 = scmp.eq.s32.totalorder %s15, 1
      %p46 = por %p44, %p45
      %p47 = scmp.ne.s32.totalorder %s39, %s42
      %p48 = scmp.eq.s32.totalorder %s15, 0
      %p49 = por %p47, %p48
      %p50 = scmp.ne.s32.totalorder %s39, %s42
      %p51 = scmp.eq.s32.totalorder %s20, 1
      %p52 = por %p50, %p51
      %p53 = scmp.ne.s32.totalorder %s42, %s43
      %p54 = scmp.eq.s32.totalorder %s20, 0
      %p55 = por %p53, %p54
      %p56 = scmp.ne.s32.totalorder %s42, %s43
      %p57 = scmp.eq.s32.totalorder %s21, 1
      %p58 = por %p56, %p57
      %p60 = scmp.ne.s32.totalorder %s43, %s59
      %p61 = scmp.eq.s32.totalorder %s21, 0
      %p62 = por %p60, %p61
      %s63 = ssub.s32 %s22, %s34
      %s64 = ssub.s32 %s23, %s30
      %s65 = sor.u32 %s63, %s64
      %p66 = scmp.eq.s32.totalorder %s65, 0
      %s68 = sadd.s32 %s67, 1
      %s69 = scalar_select %p66, %s67, %s68
      %p72 = pneg %p66
      %p73 = scmp.eq.s32.totalorder %s15, 1
      %p74 = por %p72, %p73
      %p75 = scmp.ne.s32.totalorder %s67, %s70
      %p76 = scmp.eq.s32.totalorder %s15, 0
      %p77 = por %p75, %p76
      %p78 = scmp.ne.s32.totalorder %s67, %s70
      %p79 = scmp.eq.s32.totalorder %s20, 1
      %p80 = por %p78, %p79
      %p81 = scmp.ne.s32.totalorder %s70, %s71
      %p82 = scmp.eq.s32.totalorder %s20, 0
      %p83 = por %p81, %p82
      %p84 = scmp.ne.s32.totalorder %s70, %s71
      %p85 = scmp.eq.s32.totalorder %s21, 1
      %p86 = por %p84, %p85
      %p88 = scmp.ne.s32.totalorder %s71, %s87
      %p89 = scmp.eq.s32.totalorder %s21, 0
      %p90 = por %p88, %p89
      %s92 = sadd.s32 %s91, 1
      %p95 = scmp.eq.s32.totalorder %s15, 1
      %p96 = scmp.ne.s32.totalorder %s91, %s93
      %p97 = scmp.eq.s32.totalorder %s15, 0
      %p98 = por %p96, %p97
      %p99 = scmp.ne.s32.totalorder %s91, %s93
      %p100 = scmp.eq.s32.totalorder %s20, 1
      %p101 = por %p99, %p100
      %p102 = scmp.ne.s32.totalorder %s93, %s94
      %p103 = scmp.eq.s32.totalorder %s20, 0
      %p104 = por %p102, %p103
      %p105 = scmp.ne.s32.totalorder %s93, %s94
      %p106 = scmp.eq.s32.totalorder %s21, 1
      %p107 = por %p105, %p106
      %p109 = scmp.ne.s32.totalorder %s94, %s108
      %p110 = scmp.eq.s32.totalorder %s21, 0
      %p111 = por %p109, %p110
      %s113 = sadd.s32 %s112, 1
      %p116 = scmp.eq.s32.totalorder %s15, 1
      %p117 = scmp.ne.s32.totalorder %s112, %s114
      %p118 = scmp.eq.s32.totalorder %s15, 0
      %p119 = por %p117, %p118
      %p120 = scmp.ne.s32.totalorder %s112, %s114
      %p121 = scmp.eq.s32.totalorder %s20, 1
      %p122 = por %p120, %p121
      %p123 = scmp.ne.s32.totalorder %s114, %s115
      %p124 = scmp.eq.s32.totalorder %s20, 0
      %p125 = por %p123, %p124
      %p126 = scmp.ne.s32.totalorder %s114, %s115
      %p127 = scmp.eq.s32.totalorder %s21, 1
      %p128 = por %p126, %p127
      %p130 = scmp.ne.s32.totalorder %s115, %s129
      %p131 = scmp.eq.s32.totalorder %s21, 0
      %p132 = por %p130, %p131
      %s134 = sadd.s32 %s133, 1
      %p137 = scmp.eq.s32.totalorder %s15, 1
      %p138 = scmp.ne.s32.totalorder %s133, %s135
      %p139 = scmp.eq.s32.totalorder %s15, 0
      %p140 = por %p138, %p139
      %p141 = scmp.ne.s32.totalorder %s133, %s135
      %p142 = scmp.eq.s32.totalorder %s20, 1
      %p143 = por %p141, %p142
      %p144 = scmp.ne.s32.totalorder %s135, %s136
      %p145 = scmp.eq.s32.totalorder %s20, 0
      %p146 = por %p144, %p145
      %p147 = scmp.ne.s32.totalorder %s135, %s136
      %p148 = scmp.eq.s32.totalorder %s21, 1
      %p149 = por %p147, %p148
      %p151 = scmp.ne.s32.totalorder %s136, %s150
      %p152 = scmp.eq.s32.totalorder %s21, 0
      %p153 = por %p151, %p152
      %s155 = sadd.s32 %s154, 1
      %p158 = scmp.eq.s32.totalorder %s15, 1
      %p159 = scmp.ne.s32.totalorder %s154, %s156
      %p160 = scmp.eq.s32.totalorder %s15, 0
      %p161 = por %p159, %p160
      %p162 = scmp.ne.s32.totalorder %s154, %s156
      %p163 = scmp.eq.s32.totalorder %s20, 1
      %p164 = por %p162, %p163
      %p165 = scmp.ne.s32.totalorder %s156, %s157
      %p166 = scmp.eq.s32.totalorder %s20, 0
      %p167 = por %p165, %p166
      %p168 = scmp.ne.s32.totalorder %s156, %s157
      %p169 = scmp.eq.s32.totalorder %s21, 1
      %p170 = por %p168, %p169
      %p172 = scmp.ne.s32.totalorder %s157, %s171
      %p173 = scmp.eq.s32.totalorder %s21, 0
      %p174 = por %p172, %p173
      %s176 = sadd.s32 %s175, 1
      %p179 = scmp.eq.s32.totalorder %s15, 1
      %p180 = scmp.ne.s32.totalorder %s175, %s177
      %p181 = scmp.eq.s32.totalorder %s15, 0
      %p182 = por %p180, %p181
      %p183 = scmp.ne.s32.totalorder %s175, %s177
      %p184 = scmp.eq.s32.totalorder %s20, 1
      %p185 = por %p183, %p184
      %p186 = scmp.ne.s32.totalorder %s177, %s178
      %p187 = scmp.eq.s32.totalorder %s20, 0
      %p188 = por %p186, %p187
      %p189 = scmp.ne.s32.totalorder %s177, %s178
      %p190 = scmp.eq.s32.totalorder %s21, 1
      %p191 = por %p189, %p190
      %p193 = scmp.ne.s32.totalorder %s178, %s192
      %p194 = scmp.eq.s32.totalorder %s21, 0
      %p195 = por %p193, %p194
      %s197 = sadd.s32 %s196, 1
      %p200 = scmp.eq.s32.totalorder %s15, 1
      %p201 = scmp.ne.s32.totalorder %s196, %s198
      %p202 = scmp.eq.s32.totalorder %s15, 0
      %p203 = por %p201, %p202
      %p204 = scmp.ne.s32.totalorder %s196, %s198
      %p205 = scmp.eq.s32.totalorder %s20, 1
      %p206 = por %p204, %p205
      %p207 = scmp.ne.s32.totalorder %s198, %s199
      %p208 = scmp.eq.s32.totalorder %s20, 0
      %p209 = por %p207, %p208
      %p210 = scmp.ne.s32.totalorder %s198, %s199
      %p211 = scmp.eq.s32.totalorder %s21, 1
      %p212 = por %p210, %p211
      %p214 = scmp.ne.s32.totalorder %s199, %s213
      %p215 = scmp.eq.s32.totalorder %s21, 0
      %p216 = por %p214, %p215
      %s217 = ssub.s32 %s22, %s34
      %s218 = ssub.s32 %s23, %s30
      %s219 = sor.u32 %s217, %s218
      %p220 = scmp.eq.s32.totalorder %s219, 0
      %s222 = sadd.s32 %s221, 1
      %s223 = scalar_select %p220, %s221, %s222
      %p226 = pneg %p220
      %p227 = scmp.eq.s32.totalorder %s15, 1
      %p228 = por %p226, %p227
      %p229 = scmp.ne.s32.totalorder %s221, %s224
      %p230 = scmp.eq.s32.totalorder %s15, 0
      %p231 = por %p229, %p230
      %p232 = scmp.ne.s32.totalorder %s221, %s224
      %p233 = scmp.eq.s32.totalorder %s20, 1
      %p234 = por %p232, %p233
      %p235 = scmp.ne.s32.totalorder %s224, %s225
      %p236 = scmp.eq.s32.totalorder %s20, 0
      %p237 = por %p235, %p236
      %p238 = scmp.ne.s32.totalorder %s224, %s225
      %p239 = scmp.eq.s32.totalorder %s21, 1
      %p240 = por %p238, %p239
      %p242 = scmp.ne.s32.totalorder %s225, %s241
      %p243 = scmp.eq.s32.totalorder %s21, 0
      %p244 = por %p242, %p243
      %p245 = scmp.le.s32.totalorder 1, %s15
      %p246 = scmp.lt.s32.totalorder %s15, 3
      %p247 = pnand %p245, %p246
      %p248 = pneg %p247
      // Predicated region
      $region9: #{_lambda_.2} parent=5 // pred_check
        _
      $region10: #{_lambda_.2} parent=5 // pred_check_branch
        %250 = sbr.rel (%p247) target = $region12
      $region11: #{_lambda_.2} parent=5 // pred_region
        %s251 = ssub.s32 %s15, 1
        // Predicated region
        $region13: #{_lambda_.2} parent=11 // pred_check
          %p252 = pneg %p104
        $region14: #{_lambda_.2} parent=11 // pred_check_branch
          %254 = sbr.rel (%p252) target = $region16
        $region15: #{_lambda_.2} parent=11 // pred_region
          _
        $region16: #{_lambda_.2} parent=11 // pred_fallthru
          _
        // Predicated region
        $region17: #{_lambda_.2} parent=11 // pred_check
          %p255 = pneg %p125
        $region18: #{_lambda_.2} parent=11 // pred_check_branch
          %257 = sbr.rel (%p255) target = $region20
        $region19: #{_lambda_.2} parent=11 // pred_region
          _
        $region20: #{_lambda_.2} parent=11 // pred_fallthru
          _
        // Predicated region
        $region21: #{_lambda_.2} parent=11 // pred_check
          %p258 = pneg %p146
        $region22: #{_lambda_.2} parent=11 // pred_check_branch
          %260 = sbr.rel (%p258) target = $region24
        $region23: #{_lambda_.2} parent=11 // pred_region
          _
        $region24: #{_lambda_.2} parent=11 // pred_fallthru
          _
        // Predicated region
        $region25: #{_lambda_.2} parent=11 // pred_check
          %p261 = pneg %p167
        $region26: #{_lambda_.2} parent=11 // pred_check_branch
          %263 = sbr.rel (%p261) target = $region28
        $region27: #{_lambda_.2} parent=11 // pred_region
          _
        $region28: #{_lambda_.2} parent=11 // pred_fallthru
          _
        // Predicated region
        $region29: #{_lambda_.2} parent=11 // pred_check
          %p264 = pneg %p188
        $region30: #{_lambda_.2} parent=11 // pred_check_branch
          %266 = sbr.rel (%p264) target = $region32
        $region31: #{_lambda_.2} parent=11 // pred_region
          _
        $region32: #{_lambda_.2} parent=11 // pred_fallthru
          _
        // Predicated region
        $region33: #{_lambda_.2} parent=11 // pred_check
          %p267 = pneg %p209
        $region34: #{_lambda_.2} parent=11 // pred_check_branch
          %269 = sbr.rel (%p267) target = $region36
        $region35: #{_lambda_.2} parent=11 // pred_region
          %s271 = ssub.s32 128, 128
          %272 = vsyncadd [#allocation4], %s271
          %s274 = sshll.u32 [#allocation3], 4
          %s275 = int_to_ptr.vmem [resolvable:$true] %s274
          %277 = dma.hbm_to_vmem [thread:$0]  %s7, 128, %s275, [#allocation4]
        $region36: #{_lambda_.2} parent=11 // pred_fallthru
          _
      $region12: #{_lambda_.2} parent=5 // pred_fallthru
        _
      %p278 = scmp.lt.s32.totalorder %s15, 2
      // Predicated region
      $region37: #{_lambda_.2} parent=5 // pred_check
        %p279 = pneg %p278
      $region38: #{_lambda_.2} parent=5 // pred_check_branch
        %281 = sbr.rel (%p279) target = $region40
      $region39: #{_lambda_.2} parent=5 // pred_region
        // Predicated region
        $region41: #{_lambda_.2} parent=39 // pred_check
          %p282 = pneg %p49
        $region42: #{_lambda_.2} parent=39 // pred_check_branch
          %284 = sbr.rel (%p282) target = $region44
        $region43: #{_lambda_.2} parent=39 // pred_region
          %p285 = scmp.lt.s32.totalorder %s22, 1
          %s286 = scalar_select %p285, %s22, 1
          %p287 = scmp.lt.s32.totalorder %s23, 0
          %s288 = scalar_select %p287, %s23, 0
          %s289 = sadd.s32 %s288, %s286
          %s290 = smul.addr %s289, 2
          %s291 = scalar_lea.vmem %s0, %s290
        $region44: #{_lambda_.2} parent=39 // pred_fallthru
          _
        // Predicated region
        $region45: #{_lambda_.2} parent=39 // pred_check
          %p292 = pneg %p77
        $region46: #{_lambda_.2} parent=39 // pred_check_branch
          %294 = sbr.rel (%p292) target = $region48
        $region47: #{_lambda_.2} parent=39 // pred_region
          %p295 = scmp.lt.s32.totalorder %s22, 1
          %s296 = scalar_select %p295, %s22, 1
          %p297 = scmp.lt.s32.totalorder %s23, 0
          %s298 = scalar_select %p297, %s23, 0
          %s299 = sadd.s32 %s298, %s296
          %s300 = smul.addr %s299, 2
          %s301 = scalar_lea.vmem %s1, %s300
        $region48: #{_lambda_.2} parent=39 // pred_fallthru
          _
      $region40: #{_lambda_.2} parent=5 // pred_fallthru
        _
      %p302 = scmp.le.s32.totalorder 1, %s15
      %p303 = scmp.lt.s32.totalorder %s15, 3
      %p304 = pnand %p302, %p303
      %p305 = pneg %p304
      // Predicated region
      $region49: #{_lambda_.2} parent=5 // pred_check
        _
      $region50: #{_lambda_.2} parent=5 // pred_check_branch
        %307 = sbr.rel (%p304) target = $region52
      $region51: #{_lambda_.2} parent=5 // pred_region
        %s308 = ssub.s32 %s15, 1
        // Predicated region
        $region53: #{_lambda_.2} parent=51 // pred_check
          %p309 = pneg %p209
        $region54: #{_lambda_.2} parent=51 // pred_check_branch
          %311 = sbr.rel (%p309) target = $region56
        $region55: #{_lambda_.2} parent=51 // pred_region
          %312 = dma.done [#allocation4], 128
        $region56: #{_lambda_.2} parent=51 // pred_fallthru
          _
        %p313 = scmp.lt.s32.totalorder %s24, 1
        %s314 = scalar_select %p313, %s24, 1
        %p315 = scmp.lt.s32.totalorder %s25, 0
        %s316 = scalar_select %p315, %s25, 0
        %s317 = sadd.s32 %s316, %s314
        %s318 = smul.addr %s317, 2
        %s319 = scalar_lea.vmem %s0, %s318
        %p320 = pneg %p55
        %p321 = pneg %p52
        %p322 = scmp.lt.s32.totalorder %s24, 1
        %s323 = scalar_select %p322, %s24, 1
        %p324 = scmp.lt.s32.totalorder %s25, 0
        %s325 = scalar_select %p324, %s25, 0
        %s326 = sadd.s32 %s325, %s323
        %s327 = smul.addr %s326, 2
        %s328 = scalar_lea.vmem %s1, %s327
        %p329 = pneg %p83
        %p330 = pneg %p80
        %p331 = pneg %p104
        %p332 = pneg %p101
        %p333 = pneg %p125
        %p334 = pneg %p122
        %p335 = pneg %p146
        %p336 = pneg %p143
        %p337 = pneg %p167
        %p338 = pneg %p164
        %p339 = pneg %p188
        %p340 = pneg %p185
        %p341 = pneg %p209
        %p342 = pneg %p206
        %p343 = pneg %p237
        %p344 = pneg %p234
        %p345 = scmp.lt.s32.totalorder %s24, 1
        %s346 = scalar_select %p345, %s24, 1
        %p347 = scmp.lt.s32.totalorder %s25, 0
        %s348 = scalar_select %p347, %s25, 0
        %s349 = sadd.s32 %s348, %s346
        %s350 = smul.addr %s349, 4
        %s351 = scalar_lea.vmem %s8, %s350
        %p352 = scmp.lt.s32.totalorder %s24, 1
        %s353 = scalar_select %p352, %s24, 1
        %p354 = scmp.lt.s32.totalorder %s25, 0
        %s355 = scalar_select %p354, %s25, 0
        %s356 = sadd.s32 %s355, %s353
        %s357 = smul.addr %s356, 2
        %s358 = scalar_lea.vmem %s0, %s357
        %p359 = scmp.lt.s32.totalorder %s24, 1
        %s360 = scalar_select %p359, %s24, 1
        %p361 = scmp.lt.s32.totalorder %s25, 0
        %s362 = scalar_select %p361, %s25, 0
        %s363 = sadd.s32 %s362, %s360
        %s364 = smul.addr %s363, 2
        %s365 = scalar_lea.vmem %s1, %s364
        %p366 = scmp.lt.s32.totalorder %s24, 1
        %s367 = scalar_select %p366, %s24, 1
        %p368 = scmp.lt.s32.totalorder %s25, 0
        %s369 = scalar_select %p368, %s25, 0
        %s370 = sadd.s32 %s369, %s367
        %s371 = smul.addr %s370, 4
        %s372 = scalar_lea.vmem %s8, %s371
        %v374 = vld [vmem:[%s365] sm:$0x3]
        %vm375 = vcmask 9216
        %376 = vst.msk [vmem:[#allocation2] sm:$0x3] %vm375, %v374
        %v377 = vld [vmem:[%s358] sm:$0x3]
        %379 = vrot.lane.b32.xlu0 %v377, 2
        %v380 = vpop.permute.xlu0 %379
        %vm382 = vcmask 140304
        %383 = vst.msk [vmem:[#allocation2] sm:$0x3] %vm382, %v380
        %v384 = vld [vmem:[%s2] sm:$0xf]
        %v385 = vld [vmem:[#allocation2] sm:$0x3]
        %s386 = scalar_lea.vmem %s2, 4
        %v387 = vld [vmem:[%s386] sm:$0xf]
        %v390 = vunpack.c.l.s4 1983009808
        %v391 = vunpack.c.0.s8 %v390
        %v392 = vlaneseq
        %v393 = vshrl.u32 %v392, 7
        %v394 = vsub.s32 %v391, %v393
        %v395 = vrot.slane %v385, %v394
        %396 = vrot.lane.b32.xlu0 %v395, 127
        %v397 = vpop.permute.xlu0 %396
        %vm398 = vcmask 31744
        %v400 = vsel %vm398, %v387, 0
        %vm402 = vcmask 1041408
        %v404 = vsel %vm402, %v397, 0
        %406 = vmatprep.subr.bf16.mxu0 0
        %407 = vmatpush1.bf16.msra.mxu0 %v404
        %408 = vmatprep.subr.bf16.mxu0 0
        %409 = vmatpush1.bf16.msra.mxu0 0
        %410 = vmatprep.subr.bf16.mxu0 0
        %411 = vmatpush1.bf16.msra.mxu0 0
        %412 = vmatprep.subr.bf16.mxu0 0
        %413 = vmatpush1.bf16.msra.mxu0 0
        %414 = vmatprep.subr.bf16.mxu0 0
        %415 = vmatpush1.bf16.msra.mxu0 0
        %416 = vmatprep.subr.bf16.mxu0 0
        %417 = vmatpush1.bf16.msra.mxu0 0
        %418 = vmatprep.subr.bf16.mxu0 0
        %419 = vmatpush1.bf16.msra.mxu0 0
        %420 = vmatprep.subr.bf16.mxu0 0
        %421 = vmatpush1.bf16.msra.mxu0 0
        %422 = vmatprep.subr.bf16.mxu0 0
        %423 = vmatpush1.bf16.msra.mxu0 0
        %424 = vmatprep.subr.bf16.mxu0 0
        %425 = vmatpush1.bf16.msra.mxu0 0
        %426 = vmatprep.subr.bf16.mxu0 0
        %427 = vmatpush1.bf16.msra.mxu0 0
        %428 = vmatprep.subr.bf16.mxu0 0
        %429 = vmatpush1.bf16.msra.mxu0 0
        %430 = vmatprep.subr.bf16.mxu0 0
        %431 = vmatpush1.bf16.msra.mxu0 0
        %432 = vmatprep.subr.bf16.mxu0 0
        %433 = vmatpush1.bf16.msra.mxu0 0
        %434 = vmatprep.subr.bf16.mxu0 0
        %435 = vmatpush1.bf16.msra.mxu0 0
        %436 = vmatprep.subr.bf16.mxu0 0
        %437 = vmatpush1.bf16.msra.mxu0 0
        %438 = vmatprep.mubr.bf16.mxu0 0
        %439 = vmatmul.mubr.bf16.gmra.mrb[0].mxu0 %v400
        %v440 = vpop.f32.mrb[0].mxu0
        %v441 = vadd.f32 0.0, %v440
        %v442 = vpop.f32.mrb[0].mxu0
        %v443 = vpop.f32.mrb[0].mxu0
        %v444 = vpop.f32.mrb[0].mxu0
        %445 = vdwg.mxu0
        %v447 = vsel %vm398, %v384, 0
        %v450 = vsel %vm402, %v385, 0
        %452 = vmatprep.subr.bf16.mxu0 0
        %453 = vmatpush1.bf16.msra.mxu0 %v450
        %454 = vmatprep.subr.bf16.mxu0 0
        %455 = vmatpush1.bf16.msra.mxu0 0
        %456 = vmatprep.subr.bf16.mxu0 0
        %457 = vmatpush1.bf16.msra.mxu0 0
        %458 = vmatprep.subr.bf16.mxu0 0
        %459 = vmatpush1.bf16.msra.mxu0 0
        %460 = vmatprep.subr.bf16.mxu0 0
        %461 = vmatpush1.bf16.msra.mxu0 0
        %462 = vmatprep.subr.bf16.mxu0 0
        %463 = vmatpush1.bf16.msra.mxu0 0
        %464 = vmatprep.subr.bf16.mxu0 0
        %465 = vmatpush1.bf16.msra.mxu0 0
        %466 = vmatprep.subr.bf16.mxu0 0
        %467 = vmatpush1.bf16.msra.mxu0 0
        %468 = vmatprep.subr.bf16.mxu0 0
        %469 = vmatpush1.bf16.msra.mxu0 0
        %470 = vmatprep.subr.bf16.mxu0 0
        %471 = vmatpush1.bf16.msra.mxu0 0
        %472 = vmatprep.subr.bf16.mxu0 0
        %473 = vmatpush1.bf16.msra.mxu0 0
        %474 = vmatprep.subr.bf16.mxu0 0
        %475 = vmatpush1.bf16.msra.mxu0 0
        %476 = vmatprep.subr.bf16.mxu0 0
        %477 = vmatpush1.bf16.msra.mxu0 0
        %478 = vmatprep.subr.bf16.mxu0 0
        %479 = vmatpush1.bf16.msra.mxu0 0
        %480 = vmatprep.subr.bf16.mxu0 0
        %481 = vmatpush1.bf16.msra.mxu0 0
        %482 = vmatprep.subr.bf16.mxu0 0
        %483 = vmatpush1.bf16.msra.mxu0 0
        %484 = vmatprep.mubr.bf16.mxu0 0
        %485 = vmatmul.mubr.bf16.gmra.mrb[0].mxu0 %v447
        %v486 = vpop.f32.mrb[0].mxu0
        %v487 = vadd.f32 %v441, %v486
        %v488 = vpop.f32.mrb[0].mxu0
        %v489 = vpop.f32.mrb[0].mxu0
        %v490 = vpop.f32.mrb[0].mxu0
        %491 = vdwg.mxu0
        %v492 = vld [vmem:[%s3] sm:$0xff]
        %494 = vset.pattern.permute.xlu0 0
        %495 = vperm.xlu0 %494, %v492
        %v496 = vpop.permute.xlu0 %495
        %v498 = vadd.f32 %v487, %v496
        %v499 = vmax.f32 %v498, 0.0
        %s500 = smul.u32 %s25, 16
        %s501 = ssub.s32 1, %s500
        %v502 = vlaneseq
        %v503 = vand.u32 %v502, 127
        %v504 = vstv %s501
        %vm505 = vcmp.ge.s32.totalorder %v503, %v504
        %v506 = vsel %vm505, %v499, 0.0
        %v507 = vpack.c.bf16 %v506, %v506
        %v508 = vld [vmem:[%s4] sm:$0xf]
        %s509 = scalar_lea.vmem %s4, 4
        %v510 = vld [vmem:[%s509] sm:$0xf]
        %512 = vrot.lane.b32.xlu0 %v507, 127
        %v513 = vpop.permute.xlu0 %512
        %vm514 = vcmask 64512
        %v516 = vsel %vm514, %v510, 0
        %vm518 = vcmask 1043456
        %v520 = vsel %vm518, %v513, 0
        %522 = vmatprep.subr.bf16.mxu0 0
        %523 = vmatpush1.bf16.msra.mxu0 %v520
        %524 = vmatprep.subr.bf16.mxu0 0
        %525 = vmatpush1.bf16.msra.mxu0 0
        %526 = vmatprep.subr.bf16.mxu0 0
        %527 = vmatpush1.bf16.msra.mxu0 0
        %528 = vmatprep.subr.bf16.mxu0 0
        %529 = vmatpush1.bf16.msra.mxu0 0
        %530 = vmatprep.subr.bf16.mxu0 0
        %531 = vmatpush1.bf16.msra.mxu0 0
        %532 = vmatprep.subr.bf16.mxu0 0
        %533 = vmatpush1.bf16.msra.mxu0 0
        %534 = vmatprep.subr.bf16.mxu0 0
        %535 = vmatpush1.bf16.msra.mxu0 0
        %536 = vmatprep.subr.bf16.mxu0 0
        %537 = vmatpush1.bf16.msra.mxu0 0
        %538 = vmatprep.subr.bf16.mxu0 0
        %539 = vmatpush1.bf16.msra.mxu0 0
        %540 = vmatprep.subr.bf16.mxu0 0
        %541 = vmatpush1.bf16.msra.mxu0 0
        %542 = vmatprep.subr.bf16.mxu0 0
        %543 = vmatpush1.bf16.msra.mxu0 0
        %544 = vmatprep.subr.bf16.mxu0 0
        %545 = vmatpush1.bf16.msra.mxu0 0
        %546 = vmatprep.subr.bf16.mxu0 0
        %547 = vmatpush1.bf16.msra.mxu0 0
        %548 = vmatprep.subr.bf16.mxu0 0
        %549 = vmatpush1.bf16.msra.mxu0 0
        %550 = vmatprep.subr.bf16.mxu0 0
        %551 = vmatpush1.bf16.msra.mxu0 0
        %552 = vmatprep.subr.bf16.mxu0 0
        %553 = vmatpush1.bf16.msra.mxu0 0
        %554 = vmatprep.mubr.bf16.mxu0 0
        %555 = vmatmul.mubr.bf16.gmra.mrb[0].mxu0 %v516
        %v556 = vpop.f32.mrb[0].mxu0
        %v557 = vadd.f32 0.0, %v556
        %v558 = vpop.f32.mrb[0].mxu0
        %v559 = vpop.f32.mrb[0].mxu0
        %v560 = vpop.f32.mrb[0].mxu0
        %561 = vdwg.mxu0
        %v563 = vsel %vm514, %v508, 0
        %v566 = vsel %vm518, %v507, 0
        %568 = vmatprep.subr.bf16.mxu0 0
        %569 = vmatpush1.bf16.msra.mxu0 %v566
        %570 = vmatprep.subr.bf16.mxu0 0
        %571 = vmatpush1.bf16.msra.mxu0 0
        %572 = vmatprep.subr.bf16.mxu0 0
        %573 = vmatpush1.bf16.msra.mxu0 0
        %574 = vmatprep.subr.bf16.mxu0 0
        %575 = vmatpush1.bf16.msra.mxu0 0
        %576 = vmatprep.subr.bf16.mxu0 0
        %577 = vmatpush1.bf16.msra.mxu0 0
        %578 = vmatprep.subr.bf16.mxu0 0
        %579 = vmatpush1.bf16.msra.mxu0 0
        %580 = vmatprep.subr.bf16.mxu0 0
        %581 = vmatpush1.bf16.msra.mxu0 0
        %582 = vmatprep.subr.bf16.mxu0 0
        %583 = vmatpush1.bf16.msra.mxu0 0
        %584 = vmatprep.subr.bf16.mxu0 0
        %585 = vmatpush1.bf16.msra.mxu0 0
        %586 = vmatprep.subr.bf16.mxu0 0
        %587 = vmatpush1.bf16.msra.mxu0 0
        %588 = vmatprep.subr.bf16.mxu0 0
        %589 = vmatpush1.bf16.msra.mxu0 0
        %590 = vmatprep.subr.bf16.mxu0 0
        %591 = vmatpush1.bf16.msra.mxu0 0
        %592 = vmatprep.subr.bf16.mxu0 0
        %593 = vmatpush1.bf16.msra.mxu0 0
        %594 = vmatprep.subr.bf16.mxu0 0
        %595 = vmatpush1.bf16.msra.mxu0 0
        %596 = vmatprep.subr.bf16.mxu0 0
        %597 = vmatpush1.bf16.msra.mxu0 0
        %598 = vmatprep.subr.bf16.mxu0 0
        %599 = vmatpush1.bf16.msra.mxu0 0
        %600 = vmatprep.mubr.bf16.mxu0 0
        %601 = vmatmul.mubr.bf16.gmra.mrb[0].mxu0 %v563
        %v602 = vpop.f32.mrb[0].mxu0
        %v603 = vadd.f32 %v557, %v602
        %v604 = vpop.f32.mrb[0].mxu0
        %v605 = vpop.f32.mrb[0].mxu0
        %v606 = vpop.f32.mrb[0].mxu0
        %607 = vdwg.mxu0
        %v608 = vld [vmem:[%s5] sm:$0xff]
        %610 = vset.pattern.permute.xlu0 0
        %611 = vperm.xlu0 %610, %v608
        %v612 = vpop.permute.xlu0 %611
        %v614 = vadd.f32 %v603, %v612
        %v615 = vmax.f32 %v614, 0.0
        %v616 = vld [vmem:[%s6] sm:$0xf]
        %v617 = vld [vmem:[%s358] sm:$0x3]
        %v618 = vld [vmem:[#allocation3] sm:$0xff]
        %620 = vset.pattern.permute.xlu0 0
        %621 = vperm.xlu0 %620, %v618
        %v622 = vpop.permute.xlu0 %621
        %v625 = vsel %vm398, %v616, 0
        %v628 = vsel %vm402, %v617, 0
        %630 = vmatprep.subr.bf16.mxu0 0
        %631 = vmatpush1.bf16.msra.mxu0 %v628
        %632 = vmatprep.subr.bf16.mxu0 0
        %633 = vmatpush1.bf16.msra.mxu0 0
        %634 = vmatprep.subr.bf16.mxu0 0
        %635 = vmatpush1.bf16.msra.mxu0 0
        %636 = vmatprep.subr.bf16.mxu0 0
        %637 = vmatpush1.bf16.msra.mxu0 0
        %638 = vmatprep.subr.bf16.mxu0 0
        %639 = vmatpush1.bf16.msra.mxu0 0
        %640 = vmatprep.subr.bf16.mxu0 0
        %641 = vmatpush1.bf16.msra.mxu0 0
        %642 = vmatprep.subr.bf16.mxu0 0
        %643 = vmatpush1.bf16.msra.mxu0 0
        %644 = vmatprep.subr.bf16.mxu0 0
        %645 = vmatpush1.bf16.msra.mxu0 0
        %646 = vmatprep.subr.bf16.mxu0 0
        %647 = vmatpush1.bf16.msra.mxu0 0
        %648 = vmatprep.subr.bf16.mxu0 0
        %649 = vmatpush1.bf16.msra.mxu0 0
        %650 = vmatprep.subr.bf16.mxu0 0
        %651 = vmatpush1.bf16.msra.mxu0 0
        %652 = vmatprep.subr.bf16.mxu0 0
        %653 = vmatpush1.bf16.msra.mxu0 0
        %654 = vmatprep.subr.bf16.mxu0 0
        %655 = vmatpush1.bf16.msra.mxu0 0
        %656 = vmatprep.subr.bf16.mxu0 0
        %657 = vmatpush1.bf16.msra.mxu0 0
        %658 = vmatprep.subr.bf16.mxu0 0
        %659 = vmatpush1.bf16.msra.mxu0 0
        %660 = vmatprep.subr.bf16.mxu0 0
        %661 = vmatpush1.bf16.msra.mxu0 0
        %662 = vmatprep.mubr.bf16.mxu0 0
        %663 = vmatmul.mubr.bf16.gmra.mrb[0].mxu0 %v625
        %v664 = vpop.f32.mrb[0].mxu0
        %v665 = vadd.f32 %v622, %v664
        %v666 = vpop.f32.mrb[0].mxu0
        %v667 = vpop.f32.mrb[0].mxu0
        %v668 = vpop.f32.mrb[0].mxu0
        %669 = vdwg.mxu0
        %v670 = vadd.f32 %v615, %v665
        %v671 = vmax.f32 %v670, 0.0
        %v672 = vpack.c.bf16 %v671, %v671
        %vm673 = vcmask 125952
        %674 = vst.msk [vmem:[%s372] sm:$0xf] %vm673, %v672
        %p675 = scmp.lt.s32.totalorder %s24, 1
        %s676 = scalar_select %p675, %s24, 1
        %p677 = scmp.lt.s32.totalorder %s25, 0
        %s678 = scalar_select %p677, %s25, 0
        %s679 = sadd.s32 %s678, %s676
        %s680 = smul.addr %s679, 4
        %s681 = scalar_lea.vmem %s8, %s680
        // Predicated region
        $region57: #{_lambda_.2} parent=51 // pred_check
          %p682 = pneg %p234
        $region58: #{_lambda_.2} parent=51 // pred_check_branch
          %684 = sbr.rel (%p682) target = $region60
        $region59: #{_lambda_.2} parent=51 // pred_region
          _
        $region60: #{_lambda_.2} parent=51 // pred_fallthru
          _
      $region52: #{_lambda_.2} parent=5 // pred_fallthru
        _
      %p685 = scmp.le.s32.totalorder 2, %s15
      // Predicated region
      $region61: #{_lambda_.2} parent=5 // pred_check
        %p686 = pneg %p685
      $region62: #{_lambda_.2} parent=5 // pred_check_branch
        %688 = sbr.rel (%p686) target = $region64
      $region63: #{_lambda_.2} parent=5 // pred_region
        %s689 = ssub.s32 %s15, 2
        // Predicated region
        $region65: #{_lambda_.2} parent=63 // pred_check
          %p690 = pneg %p240
        $region66: #{_lambda_.2} parent=63 // pred_check_branch
          %692 = sbr.rel (%p690) target = $region68
        $region67: #{_lambda_.2} parent=63 // pred_region
          %p693 = scmp.lt.s32.totalorder %s26, 1
          %s694 = scalar_select %p693, %s26, 1
          %p695 = scmp.lt.s32.totalorder %s27, 0
          %s696 = scalar_select %p695, %s27, 0
          %s697 = sadd.s32 %s696, %s694
          %s698 = smul.addr %s697, 4
          %s699 = scalar_lea.vmem %s8, %s698
        $region68: #{_lambda_.2} parent=63 // pred_fallthru
          _
      $region64: #{_lambda_.2} parent=5 // pred_fallthru
        _
    $region6: #{_lambda_.2} parent=1 // loop_footer
      %s19 = sadd.s32 1, %s15
    $region7: #{_lambda_.2} parent=1 // loop_footer_branch
      %14 = sbr.rel target = $region3
    $region8: #{_lambda_.2} parent=1 // loop_exit
      _
    %700 = vsyncpa [#allocation4], 1
    %s701 = scalar_lea.sflag [#allocation4], 1
    %702 = vsyncpa %s701, 1

// kernel: _lambda_.3
$region0: #{_lambda_.3}
  #allocation0 [shape = 'u32[]', space=smem, size = 0x4, offset = 0x4, fixed_abs, tag = 'smem constant byte address 0x4 - core index']
  #allocation1 [shape = 'u32[144,128]{1,0:T(1,128)}', space=vmem, size = 0x12000, scoped, tag = 'internal scratch']
  #allocation2 [shape = 'bf16[8,20]{1,0:T(8,128)(2,1)}', space=vmem, size = 0x800, scoped, tag = 'scratch operand']
  %s0 = inlined_call_operand.vmem [shape: bf16[2,8,16], index: 0, kind: input, shape index: {}]
  %s1 = inlined_call_operand.vmem [shape: bf16[2,1,8,4], index: 1, kind: input, shape index: {}]
  %s2 = inlined_call_operand.vmem [shape: bf16[2,8,8], index: 2, kind: input, shape index: {}]
  %s3 = inlined_call_operand.vmem [shape: f32[8,1], index: 3, kind: input, shape index: {}]
  %s4 = inlined_call_operand.vmem [shape: bf16[2,8,8], index: 4, kind: input, shape index: {}]
  %s5 = inlined_call_operand.vmem [shape: f32[8,1], index: 5, kind: input, shape index: {}]
  %s6 = inlined_call_operand.vmem [shape: bf16[2,8,16], index: 6, kind: output, shape index: {}]
  %s7 = sld [smem:[#allocation0]]
  $region57: #{_lambda_.3} parent=0
    _
  %s9 = ssub.s32 1, %s7
  %s10 = scalar_select 0, %s9, %s7
  loop: start=0, step=1, limit=4
  $region2: #{_lambda_.3} parent=0 // loop_pre_header
    _
  $region3: #{_lambda_.3} parent=0 // loop_header
    %s12 = sphi 0, %s16
    %p13 = scmp.ge.s32.totalorder %s12, 4
    %s19 = sphi 0, %s31
    %s20 = sphi 0, %s27
    %s21 = sphi 0, %s19
    %s22 = sphi 0, %s20
    %s23 = sphi 0, %s21
    %s24 = sphi 0, %s22
    %s36 = sphi 0, %s38
    %s39 = sphi 0, %s36
    %s40 = sphi 0, %s39
    %s56 = sphi 0, %s40
    %s64 = sphi 0, %s66
    %s67 = sphi 0, %s64
    %s68 = sphi 0, %s67
    %s84 = sphi 0, %s68
    %s88 = sphi 0, %s88
    %s90 = sphi 0, %s88
    %s91 = sphi 0, %s90
    %s105 = sphi 0, %s91
    %s109 = sphi 0, %s109
    %s111 = sphi 0, %s109
    %s112 = sphi 0, %s111
    %s126 = sphi 0, %s112
    %s130 = sphi 0, %s130
    %s132 = sphi 0, %s130
    %s133 = sphi 0, %s132
    %s147 = sphi 0, %s133
    %s151 = sphi 0, %s151
    %s153 = sphi 0, %s151
    %s154 = sphi 0, %s153
    %s168 = sphi 0, %s154
    %s176 = sphi 0, %s178
    %s179 = sphi 0, %s176
    %s180 = sphi 0, %s179
    %s196 = sphi 0, %s180
  $region4: #{_lambda_.3} parent=0 // loop_header_branch
    %15 = sbr.rel (%p13) target = $region8
  $region5: #{_lambda_.3} parent=0 // loop_body
    %s17 = ssub.s32 %s12, 1
    %s18 = ssub.s32 %s12, 2
    %s25 = sadd.s32 1, %s20
    %p26 = scmp.ge.s32.totalorder %s25, 1
    %s27 = scalar_select %p26, 0, %s25
    %s28 = sadd.s32 1, %s19
    %s29 = scalar_select %p26, %s28, %s19
    %p30 = scmp.ge.s32.totalorder %s29, 2
    %s31 = scalar_select %p30, 0, %s29
    %s32 = ssub.s32 %s19, %s31
    %s33 = ssub.s32 %s20, %s27
    %s34 = sor.u32 %s32, %s33
    %p35 = scmp.eq.s32.totalorder %s34, 0
    %s37 = sadd.s32 %s36, 1
    %s38 = scalar_select %p35, %s36, %s37
    %p41 = pneg %p35
    %p42 = scmp.eq.s32.totalorder %s12, 1
    %p43 = por %p41, %p42
    %p44 = scmp.ne.s32.totalorder %s36, %s39
    %p45 = scmp.eq.s32.totalorder %s12, 0
    %p46 = por %p44, %p45
    %p47 = scmp.ne.s32.totalorder %s36, %s39
    %p48 = scmp.eq.s32.totalorder %s17, 1
    %p49 = por %p47, %p48
    %p50 = scmp.ne.s32.totalorder %s39, %s40
    %p51 = scmp.eq.s32.totalorder %s17, 0
    %p52 = por %p50, %p51
    %p53 = scmp.ne.s32.totalorder %s39, %s40
    %p54 = scmp.eq.s32.totalorder %s18, 1
    %p55 = por %p53, %p54
    %p57 = scmp.ne.s32.totalorder %s40, %s56
    %p58 = scmp.eq.s32.totalorder %s18, 0
    %p59 = por %p57, %p58
    %s60 = ssub.s32 %s19, %s31
    %s61 = ssub.s32 %s20, %s27
    %s62 = sor.u32 %s60, %s61
    %p63 = scmp.eq.s32.totalorder %s62, 0
    %s65 = sadd.s32 %s64, 1
    %s66 = scalar_select %p63, %s64, %s65
    %p69 = pneg %p63
    %p70 = scmp.eq.s32.totalorder %s12, 1
    %p71 = por %p69, %p70
    %p72 = scmp.ne.s32.totalorder %s64, %s67
    %p73 = scmp.eq.s32.totalorder %s12, 0
    %p74 = por %p72, %p73
    %p75 = scmp.ne.s32.totalorder %s64, %s67
    %p76 = scmp.eq.s32.totalorder %s17, 1
    %p77 = por %p75, %p76
    %p78 = scmp.ne.s32.totalorder %s67, %s68
    %p79 = scmp.eq.s32.totalorder %s17, 0
    %p80 = por %p78, %p79
    %p81 = scmp.ne.s32.totalorder %s67, %s68
    %p82 = scmp.eq.s32.totalorder %s18, 1
    %p83 = por %p81, %p82
    %p85 = scmp.ne.s32.totalorder %s68, %s84
    %p86 = scmp.eq.s32.totalorder %s18, 0
    %p87 = por %p85, %p86
    %s89 = sadd.s32 %s88, 1
    %p92 = scmp.eq.s32.totalorder %s12, 1
    %p93 = scmp.ne.s32.totalorder %s88, %s90
    %p94 = scmp.eq.s32.totalorder %s12, 0
    %p95 = por %p93, %p94
    %p96 = scmp.ne.s32.totalorder %s88, %s90
    %p97 = scmp.eq.s32.totalorder %s17, 1
    %p98 = por %p96, %p97
    %p99 = scmp.ne.s32.totalorder %s90, %s91
    %p100 = scmp.eq.s32.totalorder %s17, 0
    %p101 = por %p99, %p100
    %p102 = scmp.ne.s32.totalorder %s90, %s91
    %p103 = scmp.eq.s32.totalorder %s18, 1
    %p104 = por %p102, %p103
    %p106 = scmp.ne.s32.totalorder %s91, %s105
    %p107 = scmp.eq.s32.totalorder %s18, 0
    %p108 = por %p106, %p107
    %s110 = sadd.s32 %s109, 1
    %p113 = scmp.eq.s32.totalorder %s12, 1
    %p114 = scmp.ne.s32.totalorder %s109, %s111
    %p115 = scmp.eq.s32.totalorder %s12, 0
    %p116 = por %p114, %p115
    %p117 = scmp.ne.s32.totalorder %s109, %s111
    %p118 = scmp.eq.s32.totalorder %s17, 1
    %p119 = por %p117, %p118
    %p120 = scmp.ne.s32.totalorder %s111, %s112
    %p121 = scmp.eq.s32.totalorder %s17, 0
    %p122 = por %p120, %p121
    %p123 = scmp.ne.s32.totalorder %s111, %s112
    %p124 = scmp.eq.s32.totalorder %s18, 1
    %p125 = por %p123, %p124
    %p127 = scmp.ne.s32.totalorder %s112, %s126
    %p128 = scmp.eq.s32.totalorder %s18, 0
    %p129 = por %p127, %p128
    %s131 = sadd.s32 %s130, 1
    %p134 = scmp.eq.s32.totalorder %s12, 1
    %p135 = scmp.ne.s32.totalorder %s130, %s132
    %p136 = scmp.eq.s32.totalorder %s12, 0
    %p137 = por %p135, %p136
    %p138 = scmp.ne.s32.totalorder %s130, %s132
    %p139 = scmp.eq.s32.totalorder %s17, 1
    %p140 = por %p138, %p139
    %p141 = scmp.ne.s32.totalorder %s132, %s133
    %p142 = scmp.eq.s32.totalorder %s17, 0
    %p143 = por %p141, %p142
    %p144 = scmp.ne.s32.totalorder %s132, %s133
    %p145 = scmp.eq.s32.totalorder %s18, 1
    %p146 = por %p144, %p145
    %p148 = scmp.ne.s32.totalorder %s133, %s147
    %p149 = scmp.eq.s32.totalorder %s18, 0
    %p150 = por %p148, %p149
    %s152 = sadd.s32 %s151, 1
    %p155 = scmp.eq.s32.totalorder %s12, 1
    %p156 = scmp.ne.s32.totalorder %s151, %s153
    %p157 = scmp.eq.s32.totalorder %s12, 0
    %p158 = por %p156, %p157
    %p159 = scmp.ne.s32.totalorder %s151, %s153
    %p160 = scmp.eq.s32.totalorder %s17, 1
    %p161 = por %p159, %p160
    %p162 = scmp.ne.s32.totalorder %s153, %s154
    %p163 = scmp.eq.s32.totalorder %s17, 0
    %p164 = por %p162, %p163
    %p165 = scmp.ne.s32.totalorder %s153, %s154
    %p166 = scmp.eq.s32.totalorder %s18, 1
    %p167 = por %p165, %p166
    %p169 = scmp.ne.s32.totalorder %s154, %s168
    %p170 = scmp.eq.s32.totalorder %s18, 0
    %p171 = por %p169, %p170
    %s172 = ssub.s32 %s19, %s31
    %s173 = ssub.s32 %s20, %s27
    %s174 = sor.u32 %s172, %s173
    %p175 = scmp.eq.s32.totalorder %s174, 0
    %s177 = sadd.s32 %s176, 1
    %s178 = scalar_select %p175, %s176, %s177
    %p181 = pneg %p175
    %p182 = scmp.eq.s32.totalorder %s12, 1
    %p183 = por %p181, %p182
    %p184 = scmp.ne.s32.totalorder %s176, %s179
    %p185 = scmp.eq.s32.totalorder %s12, 0
    %p186 = por %p184, %p185
    %p187 = scmp.ne.s32.totalorder %s176, %s179
    %p188 = scmp.eq.s32.totalorder %s17, 1
    %p189 = por %p187, %p188
    %p190 = scmp.ne.s32.totalorder %s179, %s180
    %p191 = scmp.eq.s32.totalorder %s17, 0
    %p192 = por %p190, %p191
    %p193 = scmp.ne.s32.totalorder %s179, %s180
    %p194 = scmp.eq.s32.totalorder %s18, 1
    %p195 = por %p193, %p194
    %p197 = scmp.ne.s32.totalorder %s180, %s196
    %p198 = scmp.eq.s32.totalorder %s18, 0
    %p199 = por %p197, %p198
    %p200 = scmp.le.s32.totalorder 1, %s12
    %p201 = scmp.lt.s32.totalorder %s12, 3
    %p202 = pnand %p200, %p201
    %p203 = pneg %p202
    // Predicated region
    $region9: #{_lambda_.3} parent=5 // pred_check
      _
    $region10: #{_lambda_.3} parent=5 // pred_check_branch
      %205 = sbr.rel (%p202) target = $region12
    $region11: #{_lambda_.3} parent=5 // pred_region
      %s206 = ssub.s32 %s12, 1
      // Predicated region
      $region13: #{_lambda_.3} parent=11 // pred_check
        %p207 = pneg %p101
      $region14: #{_lambda_.3} parent=11 // pred_check_branch
        %209 = sbr.rel (%p207) target = $region16
      $region15: #{_lambda_.3} parent=11 // pred_region
        _
      $region16: #{_lambda_.3} parent=11 // pred_fallthru
        _
      // Predicated region
      $region17: #{_lambda_.3} parent=11 // pred_check
        %p210 = pneg %p122
      $region18: #{_lambda_.3} parent=11 // pred_check_branch
        %212 = sbr.rel (%p210) target = $region20
      $region19: #{_lambda_.3} parent=11 // pred_region
        _
      $region20: #{_lambda_.3} parent=11 // pred_fallthru
        _
      // Predicated region
      $region21: #{_lambda_.3} parent=11 // pred_check
        %p213 = pneg %p143
      $region22: #{_lambda_.3} parent=11 // pred_check_branch
        %215 = sbr.rel (%p213) target = $region24
      $region23: #{_lambda_.3} parent=11 // pred_region
        _
      $region24: #{_lambda_.3} parent=11 // pred_fallthru
        _
      // Predicated region
      $region25: #{_lambda_.3} parent=11 // pred_check
        %p216 = pneg %p164
      $region26: #{_lambda_.3} parent=11 // pred_check_branch
        %218 = sbr.rel (%p216) target = $region28
      $region27: #{_lambda_.3} parent=11 // pred_region
        _
      $region28: #{_lambda_.3} parent=11 // pred_fallthru
        _
    $region12: #{_lambda_.3} parent=5 // pred_fallthru
      _
    %p219 = scmp.lt.s32.totalorder %s12, 2
    // Predicated region
    $region29: #{_lambda_.3} parent=5 // pred_check
      %p220 = pneg %p219
    $region30: #{_lambda_.3} parent=5 // pred_check_branch
      %222 = sbr.rel (%p220) target = $region32
    $region31: #{_lambda_.3} parent=5 // pred_region
      // Predicated region
      $region33: #{_lambda_.3} parent=31 // pred_check
        %p223 = pneg %p46
      $region34: #{_lambda_.3} parent=31 // pred_check_branch
        %225 = sbr.rel (%p223) target = $region36
      $region35: #{_lambda_.3} parent=31 // pred_region
        %p226 = scmp.lt.s32.totalorder %s19, 1
        %s227 = scalar_select %p226, %s19, 1
        %p228 = scmp.lt.s32.totalorder %s20, 0
        %s229 = scalar_select %p228, %s20, 0
        %s230 = sadd.s32 %s229, %s227
        %s231 = smul.addr %s230, 4
        %s232 = scalar_lea.vmem %s0, %s231
      $region36: #{_lambda_.3} parent=31 // pred_fallthru
        _
      // Predicated region
      $region37: #{_lambda_.3} parent=31 // pred_check
        %p233 = pneg %p74
      $region38: #{_lambda_.3} parent=31 // pred_check_branch
        %235 = sbr.rel (%p233) target = $region40
      $region39: #{_lambda_.3} parent=31 // pred_region
        %p236 = scmp.lt.s32.totalorder %s19, 1
        %s237 = scalar_select %p236, %s19, 1
        %p238 = scmp.lt.s32.totalorder %s20, 0
        %s239 = scalar_select %p238, %s20, 0
        %s240 = sadd.s32 %s239, %s237
        %s241 = smul.addr %s240, 4
        %s242 = scalar_lea.vmem %s1, %s241
      $region40: #{_lambda_.3} parent=31 // pred_fallthru
        _
    $region32: #{_lambda_.3} parent=5 // pred_fallthru
      _
    %p243 = scmp.le.s32.totalorder 1, %s12
    %p244 = scmp.lt.s32.totalorder %s12, 3
    %p245 = pnand %p243, %p244
    %p246 = pneg %p245
    // Predicated region
    $region41: #{_lambda_.3} parent=5 // pred_check
      _
    $region42: #{_lambda_.3} parent=5 // pred_check_branch
      %248 = sbr.rel (%p245) target = $region44
    $region43: #{_lambda_.3} parent=5 // pred_region
      %s249 = ssub.s32 %s12, 1
      %p250 = scmp.lt.s32.totalorder %s21, 1
      %s251 = scalar_select %p250, %s21, 1
      %p252 = scmp.lt.s32.totalorder %s22, 0
      %s253 = scalar_select %p252, %s22, 0
      %s254 = sadd.s32 %s253, %s251
      %s255 = smul.addr %s254, 4
      %s256 = scalar_lea.vmem %s0, %s255
      %p257 = pneg %p52
      %p258 = pneg %p49
      %p259 = scmp.lt.s32.totalorder %s21, 1
      %s260 = scalar_select %p259, %s21, 1
      %p261 = scmp.lt.s32.totalorder %s22, 0
      %s262 = scalar_select %p261, %s22, 0
      %s263 = sadd.s32 %s262, %s260
      %s264 = smul.addr %s263, 4
      %s265 = scalar_lea.vmem %s1, %s264
      %p266 = pneg %p80
      %p267 = pneg %p77
      %p268 = pneg %p101
      %p269 = pneg %p98
      %p270 = pneg %p122
      %p271 = pneg %p119
      %p272 = pneg %p143
      %p273 = pneg %p140
      %p274 = pneg %p164
      %p275 = pneg %p161
      %p276 = pneg %p192
      %p277 = pneg %p189
      %p278 = scmp.lt.s32.totalorder %s21, 1
      %s279 = scalar_select %p278, %s21, 1
      %p280 = scmp.lt.s32.totalorder %s22, 0
      %s281 = scalar_select %p280, %s22, 0
      %s282 = sadd.s32 %s281, %s279
      %s283 = smul.addr %s282, 4
      %s284 = scalar_lea.vmem %s6, %s283
      %p285 = scmp.lt.s32.totalorder %s21, 1
      %s286 = scalar_select %p285, %s21, 1
      %p287 = scmp.lt.s32.totalorder %s22, 0
      %s288 = scalar_select %p287, %s22, 0
      %s289 = sadd.s32 %s288, %s286
      %s290 = smul.addr %s289, 4
      %s291 = scalar_lea.vmem %s0, %s290
      %p292 = scmp.lt.s32.totalorder %s21, 1
      %s293 = scalar_select %p292, %s21, 1
      %p294 = scmp.lt.s32.totalorder %s22, 0
      %s295 = scalar_select %p294, %s22, 0
      %s296 = sadd.s32 %s295, %s293
      %s297 = smul.addr %s296, 4
      %s298 = scalar_lea.vmem %s1, %s297
      %p299 = scmp.lt.s32.totalorder %s21, 1
      %s300 = scalar_select %p299, %s21, 1
      %p301 = scmp.lt.s32.totalorder %s22, 0
      %s302 = scalar_select %p301, %s22, 0
      %s303 = sadd.s32 %s302, %s300
      %s304 = smul.addr %s303, 4
      %s305 = scalar_lea.vmem %s6, %s304
      %v307 = vld [vmem:[%s298] sm:$0xf]
      %vm308 = vcmask 27648
      %309 = vst.msk [vmem:[#allocation2] sm:$0xf] %vm308, %v307
      %v310 = vld [vmem:[%s291] sm:$0xf]
      %312 = vrot.lane.b32.xlu0 %v310, 4
      %v313 = vpop.permute.xlu0 %312
      %vm315 = vcmask 158752
      %316 = vst.msk [vmem:[#allocation2] sm:$0xf] %vm315, %v313
      %v317 = vld [vmem:[%s2] sm:$0xf]
      %v318 = vld [vmem:[#allocation2] sm:$0xf]
      %s319 = scalar_lea.vmem %s2, 4
      %v320 = vld [vmem:[%s319] sm:$0xf]
      %v322 = vunpack.c.l.b16 %v318
      %v323 = vpack.c.b16 %v322, %v322
      %324 = vrot.lane.b32.xlu0 %v323, 126
      %v325 = vpop.permute.xlu0 %324
      %vm326 = vcmask 64512
      %v328 = vsel %vm326, %v320, 0
      %vm330 = vcmask 1043456
      %v332 = vsel %vm330, %v325, 0
      %334 = vmatprep.subr.bf16.mxu0 0
      %335 = vmatpush1.bf16.msra.mxu0 %v332
      %336 = vmatprep.subr.bf16.mxu0 0
      %337 = vmatpush1.bf16.msra.mxu0 0
      %338 = vmatprep.subr.bf16.mxu0 0
      %339 = vmatpush1.bf16.msra.mxu0 0
      %340 = vmatprep.subr.bf16.mxu0 0
      %341 = vmatpush1.bf16.msra.mxu0 0
      %342 = vmatprep.subr.bf16.mxu0 0
      %343 = vmatpush1.bf16.msra.mxu0 0
      %344 = vmatprep.subr.bf16.mxu0 0
      %345 = vmatpush1.bf16.msra.mxu0 0
      %346 = vmatprep.subr.bf16.mxu0 0
      %347 = vmatpush1.bf16.msra.mxu0 0
      %348 = vmatprep.subr.bf16.mxu0 0
      %349 = vmatpush1.bf16.msra.mxu0 0
      %350 = vmatprep.subr.bf16.mxu0 0
      %351 = vmatpush1.bf16.msra.mxu0 0
      %352 = vmatprep.subr.bf16.mxu0 0
      %353 = vmatpush1.bf16.msra.mxu0 0
      %354 = vmatprep.subr.bf16.mxu0 0
      %355 = vmatpush1.bf16.msra.mxu0 0
      %356 = vmatprep.subr.bf16.mxu0 0
      %357 = vmatpush1.bf16.msra.mxu0 0
      %358 = vmatprep.subr.bf16.mxu0 0
      %359 = vmatpush1.bf16.msra.mxu0 0
      %360 = vmatprep.subr.bf16.mxu0 0
      %361 = vmatpush1.bf16.msra.mxu0 0
      %362 = vmatprep.subr.bf16.mxu0 0
      %363 = vmatpush1.bf16.msra.mxu0 0
      %364 = vmatprep.subr.bf16.mxu0 0
      %365 = vmatpush1.bf16.msra.mxu0 0
      %366 = vmatprep.mubr.bf16.mxu0 0
      %367 = vmatmul.mubr.bf16.gmra.mrb[0].mxu0 %v328
      %v368 = vpop.f32.mrb[0].mxu0
      %v369 = vadd.f32 0.0, %v368
      %v370 = vpop.f32.mrb[0].mxu0
      %v371 = vpop.f32.mrb[0].mxu0
      %v372 = vpop.f32.mrb[0].mxu0
      %373 = vdwg.mxu0
      %v375 = vsel %vm326, %v317, 0
      %v378 = vsel %vm330, %v318, 0
      %380 = vmatprep.subr.bf16.mxu0 0
      %381 = vmatpush1.bf16.msra.mxu0 %v378
      %382 = vmatprep.subr.bf16.mxu0 0
      %383 = vmatpush1.bf16.msra.mxu0 0
      %384 = vmatprep.subr.bf16.mxu0 0
      %385 = vmatpush1.bf16.msra.mxu0 0
      %386 = vmatprep.subr.bf16.mxu0 0
      %387 = vmatpush1.bf16.msra.mxu0 0
      %388 = vmatprep.subr.bf16.mxu0 0
      %389 = vmatpush1.bf16.msra.mxu0 0
      %390 = vmatprep.subr.bf16.mxu0 0
      %391 = vmatpush1.bf16.msra.mxu0 0
      %392 = vmatprep.subr.bf16.mxu0 0
      %393 = vmatpush1.bf16.msra.mxu0 0
      %394 = vmatprep.subr.bf16.mxu0 0
      %395 = vmatpush1.bf16.msra.mxu0 0
      %396 = vmatprep.subr.bf16.mxu0 0
      %397 = vmatpush1.bf16.msra.mxu0 0
      %398 = vmatprep.subr.bf16.mxu0 0
      %399 = vmatpush1.bf16.msra.mxu0 0
      %400 = vmatprep.subr.bf16.mxu0 0
      %401 = vmatpush1.bf16.msra.mxu0 0
      %402 = vmatprep.subr.bf16.mxu0 0
      %403 = vmatpush1.bf16.msra.mxu0 0
      %404 = vmatprep.subr.bf16.mxu0 0
      %405 = vmatpush1.bf16.msra.mxu0 0
      %406 = vmatprep.subr.bf16.mxu0 0
      %407 = vmatpush1.bf16.msra.mxu0 0
      %408 = vmatprep.subr.bf16.mxu0 0
      %409 = vmatpush1.bf16.msra.mxu0 0
      %410 = vmatprep.subr.bf16.mxu0 0
      %411 = vmatpush1.bf16.msra.mxu0 0
      %412 = vmatprep.mubr.bf16.mxu0 0
      %413 = vmatmul.mubr.bf16.gmra.mrb[0].mxu0 %v375
      %v414 = vpop.f32.mrb[0].mxu0
      %v415 = vadd.f32 %v369, %v414
      %v416 = vpop.f32.mrb[0].mxu0
      %v417 = vpop.f32.mrb[0].mxu0
      %v418 = vpop.f32.mrb[0].mxu0
      %419 = vdwg.mxu0
      %v420 = vld [vmem:[%s3] sm:$0xff]
      %422 = vset.pattern.permute.xlu0 0
      %423 = vperm.xlu0 %422, %v420
      %v424 = vpop.permute.xlu0 %423
      %v426 = vadd.f32 %v415, %v424
      %v427 = vmax.f32 %v426, 0.0
      %s428 = smul.u32 %s22, 16
      %s429 = ssub.s32 2, %s428
      %v430 = vlaneseq
      %v431 = vand.u32 %v430, 127
      %v432 = vstv %s429
      %vm433 = vcmp.ge.s32.totalorder %v431, %v432
      %v434 = vsel %vm433, %v427, 0.0
      %v435 = vpack.c.bf16 %v434, %v434
      %v436 = vld [vmem:[%s4] sm:$0xf]
      %s437 = scalar_lea.vmem %s4, 4
      %v438 = vld [vmem:[%s437] sm:$0xf]
      %440 = vrot.lane.b32.xlu0 %v435, 126
      %v441 = vpop.permute.xlu0 %440
      %v443 = vsel %vm326, %v438, 0
      %v446 = vsel %vm330, %v441, 0
      %448 = vmatprep.subr.bf16.mxu0 0
      %449 = vmatpush1.bf16.msra.mxu0 %v446
      %450 = vmatprep.subr.bf16.mxu0 0
      %451 = vmatpush1.bf16.msra.mxu0 0
      %452 = vmatprep.subr.bf16.mxu0 0
      %453 = vmatpush1.bf16.msra.mxu0 0
      %454 = vmatprep.subr.bf16.mxu0 0
      %455 = vmatpush1.bf16.msra.mxu0 0
      %456 = vmatprep.subr.bf16.mxu0 0
      %457 = vmatpush1.bf16.msra.mxu0 0
      %458 = vmatprep.subr.bf16.mxu0 0
      %459 = vmatpush1.bf16.msra.mxu0 0
      %460 = vmatprep.subr.bf16.mxu0 0
      %461 = vmatpush1.bf16.msra.mxu0 0
      %462 = vmatprep.subr.bf16.mxu0 0
      %463 = vmatpush1.bf16.msra.mxu0 0
      %464 = vmatprep.subr.bf16.mxu0 0
      %465 = vmatpush1.bf16.msra.mxu0 0
      %466 = vmatprep.subr.bf16.mxu0 0
      %467 = vmatpush1.bf16.msra.mxu0 0
      %468 = vmatprep.subr.bf16.mxu0 0
      %469 = vmatpush1.bf16.msra.mxu0 0
      %470 = vmatprep.subr.bf16.mxu0 0
      %471 = vmatpush1.bf16.msra.mxu0 0
      %472 = vmatprep.subr.bf16.mxu0 0
      %473 = vmatpush1.bf16.msra.mxu0 0
      %474 = vmatprep.subr.bf16.mxu0 0
      %475 = vmatpush1.bf16.msra.mxu0 0
      %476 = vmatprep.subr.bf16.mxu0 0
      %477 = vmatpush1.bf16.msra.mxu0 0
      %478 = vmatprep.subr.bf16.mxu0 0
      %479 = vmatpush1.bf16.msra.mxu0 0
      %480 = vmatprep.mubr.bf16.mxu0 0
      %481 = vmatmul.mubr.bf16.gmra.mrb[0].mxu0 %v443
      %v482 = vpop.f32.mrb[0].mxu0
      %v483 = vadd.f32 0.0, %v482
      %v484 = vpop.f32.mrb[0].mxu0
      %v485 = vpop.f32.mrb[0].mxu0
      %v486 = vpop.f32.mrb[0].mxu0
      %487 = vdwg.mxu0
      %v489 = vsel %vm326, %v436, 0
      %v492 = vsel %vm330, %v435, 0
      %494 = vmatprep.subr.bf16.mxu0 0
      %495 = vmatpush1.bf16.msra.mxu0 %v492
      %496 = vmatprep.subr.bf16.mxu0 0
      %497 = vmatpush1.bf16.msra.mxu0 0
      %498 = vmatprep.subr.bf16.mxu0 0
      %499 = vmatpush1.bf16.msra.mxu0 0
      %500 = vmatprep.subr.bf16.mxu0 0
      %501 = vmatpush1.bf16.msra.mxu0 0
      %502 = vmatprep.subr.bf16.mxu0 0
      %503 = vmatpush1.bf16.msra.mxu0 0
      %504 = vmatprep.subr.bf16.mxu0 0
      %505 = vmatpush1.bf16.msra.mxu0 0
      %506 = vmatprep.subr.bf16.mxu0 0
      %507 = vmatpush1.bf16.msra.mxu0 0
      %508 = vmatprep.subr.bf16.mxu0 0
      %509 = vmatpush1.bf16.msra.mxu0 0
      %510 = vmatprep.subr.bf16.mxu0 0
      %511 = vmatpush1.bf16.msra.mxu0 0
      %512 = vmatprep.subr.bf16.mxu0 0
      %513 = vmatpush1.bf16.msra.mxu0 0
      %514 = vmatprep.subr.bf16.mxu0 0
      %515 = vmatpush1.bf16.msra.mxu0 0
      %516 = vmatprep.subr.bf16.mxu0 0
      %517 = vmatpush1.bf16.msra.mxu0 0
      %518 = vmatprep.subr.bf16.mxu0 0
      %519 = vmatpush1.bf16.msra.mxu0 0
      %520 = vmatprep.subr.bf16.mxu0 0
      %521 = vmatpush1.bf16.msra.mxu0 0
      %522 = vmatprep.subr.bf16.mxu0 0
      %523 = vmatpush1.bf16.msra.mxu0 0
      %524 = vmatprep.subr.bf16.mxu0 0
      %525 = vmatpush1.bf16.msra.mxu0 0
      %526 = vmatprep.mubr.bf16.mxu0 0
      %527 = vmatmul.mubr.bf16.gmra.mrb[0].mxu0 %v489
      %v528 = vpop.f32.mrb[0].mxu0
      %v529 = vadd.f32 %v483, %v528
      %v530 = vpop.f32.mrb[0].mxu0
      %v531 = vpop.f32.mrb[0].mxu0
      %v532 = vpop.f32.mrb[0].mxu0
      %533 = vdwg.mxu0
      %v534 = vld [vmem:[%s5] sm:$0xff]
      %536 = vset.pattern.permute.xlu0 0
      %537 = vperm.xlu0 %536, %v534
      %v538 = vpop.permute.xlu0 %537
      %v540 = vadd.f32 %v529, %v538
      %v541 = vmax.f32 %v540, 0.0
      %v542 = vld [vmem:[%s291] sm:$0xf]
      %v543 = vunpack.c.l.bf16 %v542
      %v544 = vadd.f32 %v541, %v543
      %v545 = vmax.f32 %v544, 0.0
      %v546 = vpack.c.bf16 %v545, %v545
      %vm547 = vcmask 125952
      %548 = vst.msk [vmem:[%s305] sm:$0xf] %vm547, %v546
      %p549 = scmp.lt.s32.totalorder %s21, 1
      %s550 = scalar_select %p549, %s21, 1
      %p551 = scmp.lt.s32.totalorder %s22, 0
      %s552 = scalar_select %p551, %s22, 0
      %s553 = sadd.s32 %s552, %s550
      %s554 = smul.addr %s553, 4
      %s555 = scalar_lea.vmem %s6, %s554
      // Predicated region
      $region45: #{_lambda_.3} parent=43 // pred_check
        %p556 = pneg %p189
      $region46: #{_lambda_.3} parent=43 // pred_check_branch
        %558 = sbr.rel (%p556) target = $region48
      $region47: #{_lambda_.3} parent=43 // pred_region
        _
      $region48: #{_lambda_.3} parent=43 // pred_fallthru
        _
    $region44: #{_lambda_.3} parent=5 // pred_fallthru
      _
    %p559 = scmp.le.s32.totalorder 2, %s12
    // Predicated region
    $region49: #{_lambda_.3} parent=5 // pred_check
      %p560 = pneg %p559
    $region50: #{_lambda_.3} parent=5 // pred_check_branch
      %562 = sbr.rel (%p560) target = $region52
    $region51: #{_lambda_.3} parent=5 // pred_region
      %s563 = ssub.s32 %s12, 2
      // Predicated region
      $region53: #{_lambda_.3} parent=51 // pred_check
        %p564 = pneg %p195
      $region54: #{_lambda_.3} parent=51 // pred_check_branch
        %566 = sbr.rel (%p564) target = $region56
      $region55: #{_lambda_.3} parent=51 // pred_region
        %p567 = scmp.lt.s32.totalorder %s23, 1
        %s568 = scalar_select %p567, %s23, 1
        %p569 = scmp.lt.s32.totalorder %s24, 0
        %s570 = scalar_select %p569, %s24, 0
        %s571 = sadd.s32 %s570, %s568
        %s572 = smul.addr %s571, 4
        %s573 = scalar_lea.vmem %s6, %s572
      $region56: #{_lambda_.3} parent=51 // pred_fallthru
        _
    $region52: #{_lambda_.3} parent=5 // pred_fallthru
      _
  $region6: #{_lambda_.3} parent=0 // loop_footer
    %s16 = sadd.s32 1, %s12
  $region7: #{_lambda_.3} parent=0 // loop_footer_branch
    %11 = sbr.rel target = $region3
  $region8: #{_lambda_.3} parent=0 // loop_exit
    _

</llo_original>
